<compile_context>
chip_gen: v5e
topology: v5e:2x2
jax: 0.10.0
libtpu: 0.0.40
codegen_flags: <defaults>
</compile_context>

<pallas_src>
import jax
import jax.numpy as jnp
from jax.experimental import pallas as pl
from jax.experimental.pallas import tpu as pltpu

KH, KW = 3, 3          # kernel size realizing 'same' padding (pad = 1)
PAD = KH // 2


def convT_tanh_kernel(w_ref, b_ref, x_ref, o_ref):
    # w_ref: SMEM (Cin*Cout*KH*KW,)  spatially-flipped weights, flattened row-major
    #        over (ci, co, kh, kw)
    # b_ref: SMEM (Cout,)            bias
    # x_ref: VMEM (1, Cin, Hp, Wp)   zero-padded input image (one batch element)
    # o_ref: VMEM (1, Cout, H, W)    output image (NCHW slice)
    _, cin, _, _ = x_ref.shape
    _, cout, h, w = o_ref.shape

    taps = [(kh, kw) for kh in range(KH) for kw in range(KW)]

    # Load each padded channel plane once and build its 9 shifted tap windows in
    # VMEM (static sublane/lane slices); reused for every output channel.
    wins = []
    for ci in range(cin):
        plane = x_ref[0, ci, :, :]                                   # (Hp, Wp) f32
        wins.append([plane[kh:kh + h, kw:kw + w] for (kh, kw) in taps])

    for co in range(cout):
        acc = jnp.full((h, w), b_ref[co], dtype=jnp.float32)         # bias folded in
        for ci in range(cin):
            for t, (kh, kw) in enumerate(taps):
                widx = ((ci * cout + co) * KH + kh) * KW + kw
                acc = acc + w_ref[widx] * wins[ci][t]
        o_ref[0, co, :, :] = jnp.tanh(acc).astype(o_ref.dtype)


def conv_transpose_tanh(x_nchw, weight, bias):
    """x_nchw: (N, Cin, H, W); weight: (Cin, Cout, KH, KW) [torch ConvTranspose2d layout]."""
    N, Cin, H, W = x_nchw.shape
    Cout = weight.shape[1]
    Hp, Wp = H + 2 * PAD, W + 2 * PAD

    # Stride-1 transposed conv == cross-correlation with the spatially flipped kernel
    # over the zero-padded input.  Only the pad is done wrapper-side (cheap, ~1x x).
    x_pad = jnp.pad(x_nchw, ((0, 0), (0, 0), (PAD, PAD), (PAD, PAD)))
    w_flip = weight[:, :, ::-1, ::-1]                                # (Cin, Cout, KH, KW)
    w_flat = w_flip.reshape(-1).astype(jnp.float32)                  # SMEM scalars
    b = bias.astype(jnp.float32)

    return pl.pallas_call(
        convT_tanh_kernel,
        out_shape=jax.ShapeDtypeStruct((N, Cout, H, W), x_nchw.dtype),
        grid_spec=pltpu.PrefetchScalarGridSpec(
            num_scalar_prefetch=0,
            grid=(N,),                                               # one image / step
            in_specs=[
                pl.BlockSpec(memory_space=pltpu.MemorySpace.SMEM),   # weights
                pl.BlockSpec(memory_space=pltpu.MemorySpace.SMEM),   # bias
                pl.BlockSpec((1, Cin, Hp, Wp), lambda n: (n, 0, 0, 0)),
            ],
            out_specs=pl.BlockSpec((1, Cout, H, W), lambda n: (n, 0, 0, 0)),
        ),
        compiler_params=pltpu.CompilerParams(
            dimension_semantics=("parallel",)),                      # megacore over N
    )(w_flat, b, x_pad)


def ref_conv_transpose_tanh(x, weight, bias):
    """Pure-JAX reference using the direct (scatter) definition of ConvTranspose2d."""
    N, Cin, H, W = x.shape
    Cout = weight.shape[1]
    y = jnp.zeros((N, Cout, H + KH - 1, W + KW - 1), jnp.float32)
    for kh in range(KH):
        for kw in range(KW):
            contrib = jnp.einsum('nihw,io->nohw', x, weight[:, :, kh, kw],
                                 precision=jax.lax.Precision.HIGHEST)
            y = y.at[:, :, kh:kh + H, kw:kw + W].add(contrib)
    y = y[:, :, PAD:PAD + H, PAD:PAD + W] + bias[None, :, None, None]
    return jnp.tanh(y)


if __name__ == "__main__":
    key = jax.random.PRNGKey(0)
    kx, kw, kb = jax.random.split(key, 3)

    # Small shapes consistent with the module: (N, 4, H, W)
    N, Cin, Cout, H, W = 2, 4, 3, 16, 16
    x = jax.random.normal(kx, (N, Cin, H, W), jnp.float32)

    # Deterministic parameter init (ConvTranspose2d weight layout: (Cin, Cout, KH, KW))
    fan_in = Cin * KH * KW
    bound = 1.0 / (fan_in ** 0.5)
    weight = jax.random.uniform(kw, (Cin, Cout, KH, KW), jnp.float32, -bound, bound)
    bias = jax.random.uniform(kb, (Cout,), jnp.float32, -bound, bound)

    out = conv_transpose_tanh(x, weight, bias)
    out = jax.block_until_ready(out)

    ref = ref_conv_transpose_tanh(x, weight, bias)
    assert out.shape == (N, Cout, H, W)
    assert jnp.allclose(out, ref, atol=1e-5, rtol=1e-5)

    print("KERNEL_OK")
</pallas_src>

<mosaic_0001>
module attributes {stable_mosaic.version = 11 : i64} {
  func.func @convT_tanh_kernel(%arg0: i32, %arg1: memref<108xf32, #tpu.memory_space<smem>>, %arg2: memref<3xf32, #tpu.memory_space<smem>>, %arg3: memref<1x4x18x18xf32, #tpu.memory_space<vmem>>, %arg4: memref<1x3x16x16xf32, #tpu.memory_space<vmem>>) attributes {dimension_semantics = [#tpu.dimension_semantics<parallel>], iteration_bounds = array<i64: 2>, scalar_prefetch = 0 : i64, scratch_operands = 0 : i64, tpu.core_type = #tpu.core_type<tc>, window_params = [{transform_indices = @transform_0, window_bounds = array<i64: 108>}, {transform_indices = @transform_1, window_bounds = array<i64: 3>}, {transform_indices = @transform_2, window_bounds = array<i64: 1, 4, 18, 18>}, {transform_indices = @transform_3, window_bounds = array<i64: 1, 3, 16, 16>}]} {
    %c0 = arith.constant 0 : index
    %c0_0 = arith.constant 0 : index
    %c0_1 = arith.constant 0 : index
    %c0_2 = arith.constant 0 : index
    %0 = vector.load %arg3[%c0, %c0_0, %c0_1, %c0_2] : memref<1x4x18x18xf32, #tpu.memory_space<vmem>>, vector<1x1x18x18xf32>
    %1 = vector.shape_cast %0 : vector<1x1x18x18xf32> to vector<18x18xf32>
    %2 = vector.extract_strided_slice %1 {offsets = [0, 0], sizes = [16, 16], strides = [1, 1]} : vector<18x18xf32> to vector<16x16xf32>
    %3 = vector.extract_strided_slice %1 {offsets = [0, 1], sizes = [16, 16], strides = [1, 1]} : vector<18x18xf32> to vector<16x16xf32>
    %4 = vector.extract_strided_slice %1 {offsets = [0, 2], sizes = [16, 16], strides = [1, 1]} : vector<18x18xf32> to vector<16x16xf32>
    %5 = vector.extract_strided_slice %1 {offsets = [1, 0], sizes = [16, 16], strides = [1, 1]} : vector<18x18xf32> to vector<16x16xf32>
    %6 = vector.extract_strided_slice %1 {offsets = [1, 1], sizes = [16, 16], strides = [1, 1]} : vector<18x18xf32> to vector<16x16xf32>
    %7 = vector.extract_strided_slice %1 {offsets = [1, 2], sizes = [16, 16], strides = [1, 1]} : vector<18x18xf32> to vector<16x16xf32>
    %8 = vector.extract_strided_slice %1 {offsets = [2, 0], sizes = [16, 16], strides = [1, 1]} : vector<18x18xf32> to vector<16x16xf32>
    %9 = vector.extract_strided_slice %1 {offsets = [2, 1], sizes = [16, 16], strides = [1, 1]} : vector<18x18xf32> to vector<16x16xf32>
    %10 = vector.extract_strided_slice %1 {offsets = [2, 2], sizes = [16, 16], strides = [1, 1]} : vector<18x18xf32> to vector<16x16xf32>
    %c0_3 = arith.constant 0 : index
    %c1 = arith.constant 1 : index
    %c0_4 = arith.constant 0 : index
    %c0_5 = arith.constant 0 : index
    %11 = vector.load %arg3[%c0_3, %c1, %c0_4, %c0_5] : memref<1x4x18x18xf32, #tpu.memory_space<vmem>>, vector<1x1x18x18xf32>
    %12 = vector.shape_cast %11 : vector<1x1x18x18xf32> to vector<18x18xf32>
    %13 = vector.extract_strided_slice %12 {offsets = [0, 0], sizes = [16, 16], strides = [1, 1]} : vector<18x18xf32> to vector<16x16xf32>
    %14 = vector.extract_strided_slice %12 {offsets = [0, 1], sizes = [16, 16], strides = [1, 1]} : vector<18x18xf32> to vector<16x16xf32>
    %15 = vector.extract_strided_slice %12 {offsets = [0, 2], sizes = [16, 16], strides = [1, 1]} : vector<18x18xf32> to vector<16x16xf32>
    %16 = vector.extract_strided_slice %12 {offsets = [1, 0], sizes = [16, 16], strides = [1, 1]} : vector<18x18xf32> to vector<16x16xf32>
    %17 = vector.extract_strided_slice %12 {offsets = [1, 1], sizes = [16, 16], strides = [1, 1]} : vector<18x18xf32> to vector<16x16xf32>
    %18 = vector.extract_strided_slice %12 {offsets = [1, 2], sizes = [16, 16], strides = [1, 1]} : vector<18x18xf32> to vector<16x16xf32>
    %19 = vector.extract_strided_slice %12 {offsets = [2, 0], sizes = [16, 16], strides = [1, 1]} : vector<18x18xf32> to vector<16x16xf32>
    %20 = vector.extract_strided_slice %12 {offsets = [2, 1], sizes = [16, 16], strides = [1, 1]} : vector<18x18xf32> to vector<16x16xf32>
    %21 = vector.extract_strided_slice %12 {offsets = [2, 2], sizes = [16, 16], strides = [1, 1]} : vector<18x18xf32> to vector<16x16xf32>
    %c0_6 = arith.constant 0 : index
    %c2 = arith.constant 2 : index
    %c0_7 = arith.constant 0 : index
    %c0_8 = arith.constant 0 : index
    %22 = vector.load %arg3[%c0_6, %c2, %c0_7, %c0_8] : memref<1x4x18x18xf32, #tpu.memory_space<vmem>>, vector<1x1x18x18xf32>
    %23 = vector.shape_cast %22 : vector<1x1x18x18xf32> to vector<18x18xf32>
    %24 = vector.extract_strided_slice %23 {offsets = [0, 0], sizes = [16, 16], strides = [1, 1]} : vector<18x18xf32> to vector<16x16xf32>
    %25 = vector.extract_strided_slice %23 {offsets = [0, 1], sizes = [16, 16], strides = [1, 1]} : vector<18x18xf32> to vector<16x16xf32>
    %26 = vector.extract_strided_slice %23 {offsets = [0, 2], sizes = [16, 16], strides = [1, 1]} : vector<18x18xf32> to vector<16x16xf32>
    %27 = vector.extract_strided_slice %23 {offsets = [1, 0], sizes = [16, 16], strides = [1, 1]} : vector<18x18xf32> to vector<16x16xf32>
    %28 = vector.extract_strided_slice %23 {offsets = [1, 1], sizes = [16, 16], strides = [1, 1]} : vector<18x18xf32> to vector<16x16xf32>
    %29 = vector.extract_strided_slice %23 {offsets = [1, 2], sizes = [16, 16], strides = [1, 1]} : vector<18x18xf32> to vector<16x16xf32>
    %30 = vector.extract_strided_slice %23 {offsets = [2, 0], sizes = [16, 16], strides = [1, 1]} : vector<18x18xf32> to vector<16x16xf32>
    %31 = vector.extract_strided_slice %23 {offsets = [2, 1], sizes = [16, 16], strides = [1, 1]} : vector<18x18xf32> to vector<16x16xf32>
    %32 = vector.extract_strided_slice %23 {offsets = [2, 2], sizes = [16, 16], strides = [1, 1]} : vector<18x18xf32> to vector<16x16xf32>
    %c0_9 = arith.constant 0 : index
    %c3 = arith.constant 3 : index
    %c0_10 = arith.constant 0 : index
    %c0_11 = arith.constant 0 : index
    %33 = vector.load %arg3[%c0_9, %c3, %c0_10, %c0_11] : memref<1x4x18x18xf32, #tpu.memory_space<vmem>>, vector<1x1x18x18xf32>
    %34 = vector.shape_cast %33 : vector<1x1x18x18xf32> to vector<18x18xf32>
    %35 = vector.extract_strided_slice %34 {offsets = [0, 0], sizes = [16, 16], strides = [1, 1]} : vector<18x18xf32> to vector<16x16xf32>
    %36 = vector.extract_strided_slice %34 {offsets = [0, 1], sizes = [16, 16], strides = [1, 1]} : vector<18x18xf32> to vector<16x16xf32>
    %37 = vector.extract_strided_slice %34 {offsets = [0, 2], sizes = [16, 16], strides = [1, 1]} : vector<18x18xf32> to vector<16x16xf32>
    %38 = vector.extract_strided_slice %34 {offsets = [1, 0], sizes = [16, 16], strides = [1, 1]} : vector<18x18xf32> to vector<16x16xf32>
    %39 = vector.extract_strided_slice %34 {offsets = [1, 1], sizes = [16, 16], strides = [1, 1]} : vector<18x18xf32> to vector<16x16xf32>
    %40 = vector.extract_strided_slice %34 {offsets = [1, 2], sizes = [16, 16], strides = [1, 1]} : vector<18x18xf32> to vector<16x16xf32>
    %41 = vector.extract_strided_slice %34 {offsets = [2, 0], sizes = [16, 16], strides = [1, 1]} : vector<18x18xf32> to vector<16x16xf32>
    %42 = vector.extract_strided_slice %34 {offsets = [2, 1], sizes = [16, 16], strides = [1, 1]} : vector<18x18xf32> to vector<16x16xf32>
    %43 = vector.extract_strided_slice %34 {offsets = [2, 2], sizes = [16, 16], strides = [1, 1]} : vector<18x18xf32> to vector<16x16xf32>
    %c0_12 = arith.constant 0 : index
    %44 = memref.load %arg2[%c0_12] : memref<3xf32, #tpu.memory_space<smem>>
    %45 = vector.broadcast %44 : f32 to vector<16x16xf32>
    %c0_13 = arith.constant 0 : index
    %46 = memref.load %arg1[%c0_13] : memref<108xf32, #tpu.memory_space<smem>>
    %47 = vector.broadcast %46 : f32 to vector<16x16xf32>
    %48 = arith.mulf %47, %2 : vector<16x16xf32>
    %49 = arith.addf %45, %48 : vector<16x16xf32>
    %c1_14 = arith.constant 1 : index
    %50 = memref.load %arg1[%c1_14] : memref<108xf32, #tpu.memory_space<smem>>
    %51 = vector.broadcast %50 : f32 to vector<16x16xf32>
    %52 = arith.mulf %51, %3 : vector<16x16xf32>
    %53 = arith.addf %49, %52 : vector<16x16xf32>
    %c2_15 = arith.constant 2 : index
    %54 = memref.load %arg1[%c2_15] : memref<108xf32, #tpu.memory_space<smem>>
    %55 = vector.broadcast %54 : f32 to vector<16x16xf32>
    %56 = arith.mulf %55, %4 : vector<16x16xf32>
    %57 = arith.addf %53, %56 : vector<16x16xf32>
    %c3_16 = arith.constant 3 : index
    %58 = memref.load %arg1[%c3_16] : memref<108xf32, #tpu.memory_space<smem>>
    %59 = vector.broadcast %58 : f32 to vector<16x16xf32>
    %60 = arith.mulf %59, %5 : vector<16x16xf32>
    %61 = arith.addf %57, %60 : vector<16x16xf32>
    %c4 = arith.constant 4 : index
    %62 = memref.load %arg1[%c4] : memref<108xf32, #tpu.memory_space<smem>>
    %63 = vector.broadcast %62 : f32 to vector<16x16xf32>
    %64 = arith.mulf %63, %6 : vector<16x16xf32>
    %65 = arith.addf %61, %64 : vector<16x16xf32>
    %c5 = arith.constant 5 : index
    %66 = memref.load %arg1[%c5] : memref<108xf32, #tpu.memory_space<smem>>
    %67 = vector.broadcast %66 : f32 to vector<16x16xf32>
    %68 = arith.mulf %67, %7 : vector<16x16xf32>
    %69 = arith.addf %65, %68 : vector<16x16xf32>
    %c6 = arith.constant 6 : index
    %70 = memref.load %arg1[%c6] : memref<108xf32, #tpu.memory_space<smem>>
    %71 = vector.broadcast %70 : f32 to vector<16x16xf32>
    %72 = arith.mulf %71, %8 : vector<16x16xf32>
    %73 = arith.addf %69, %72 : vector<16x16xf32>
    %c7 = arith.constant 7 : index
    %74 = memref.load %arg1[%c7] : memref<108xf32, #tpu.memory_space<smem>>
    %75 = vector.broadcast %74 : f32 to vector<16x16xf32>
    %76 = arith.mulf %75, %9 : vector<16x16xf32>
    %77 = arith.addf %73, %76 : vector<16x16xf32>
    %c8 = arith.constant 8 : index
    %78 = memref.load %arg1[%c8] : memref<108xf32, #tpu.memory_space<smem>>
    %79 = vector.broadcast %78 : f32 to vector<16x16xf32>
    %80 = arith.mulf %79, %10 : vector<16x16xf32>
    %81 = arith.addf %77, %80 : vector<16x16xf32>
    %c27 = arith.constant 27 : index
    %82 = memref.load %arg1[%c27] : memref<108xf32, #tpu.memory_space<smem>>
    %83 = vector.broadcast %82 : f32 to vector<16x16xf32>
    %84 = arith.mulf %83, %13 : vector<16x16xf32>
    %85 = arith.addf %81, %84 : vector<16x16xf32>
    %c28 = arith.constant 28 : index
    %86 = memref.load %arg1[%c28] : memref<108xf32, #tpu.memory_space<smem>>
    %87 = vector.broadcast %86 : f32 to vector<16x16xf32>
    %88 = arith.mulf %87, %14 : vector<16x16xf32>
    %89 = arith.addf %85, %88 : vector<16x16xf32>
    %c29 = arith.constant 29 : index
    %90 = memref.load %arg1[%c29] : memref<108xf32, #tpu.memory_space<smem>>
    %91 = vector.broadcast %90 : f32 to vector<16x16xf32>
    %92 = arith.mulf %91, %15 : vector<16x16xf32>
    %93 = arith.addf %89, %92 : vector<16x16xf32>
    %c30 = arith.constant 30 : index
    %94 = memref.load %arg1[%c30] : memref<108xf32, #tpu.memory_space<smem>>
    %95 = vector.broadcast %94 : f32 to vector<16x16xf32>
    %96 = arith.mulf %95, %16 : vector<16x16xf32>
    %97 = arith.addf %93, %96 : vector<16x16xf32>
    %c31 = arith.constant 31 : index
    %98 = memref.load %arg1[%c31] : memref<108xf32, #tpu.memory_space<smem>>
    %99 = vector.broadcast %98 : f32 to vector<16x16xf32>
    %100 = arith.mulf %99, %17 : vector<16x16xf32>
    %101 = arith.addf %97, %100 : vector<16x16xf32>
    %c32 = arith.constant 32 : index
    %102 = memref.load %arg1[%c32] : memref<108xf32, #tpu.memory_space<smem>>
    %103 = vector.broadcast %102 : f32 to vector<16x16xf32>
    %104 = arith.mulf %103, %18 : vector<16x16xf32>
    %105 = arith.addf %101, %104 : vector<16x16xf32>
    %c33 = arith.constant 33 : index
    %106 = memref.load %arg1[%c33] : memref<108xf32, #tpu.memory_space<smem>>
    %107 = vector.broadcast %106 : f32 to vector<16x16xf32>
    %108 = arith.mulf %107, %19 : vector<16x16xf32>
    %109 = arith.addf %105, %108 : vector<16x16xf32>
    %c34 = arith.constant 34 : index
    %110 = memref.load %arg1[%c34] : memref<108xf32, #tpu.memory_space<smem>>
    %111 = vector.broadcast %110 : f32 to vector<16x16xf32>
    %112 = arith.mulf %111, %20 : vector<16x16xf32>
    %113 = arith.addf %109, %112 : vector<16x16xf32>
    %c35 = arith.constant 35 : index
    %114 = memref.load %arg1[%c35] : memref<108xf32, #tpu.memory_space<smem>>
    %115 = vector.broadcast %114 : f32 to vector<16x16xf32>
    %116 = arith.mulf %115, %21 : vector<16x16xf32>
    %117 = arith.addf %113, %116 : vector<16x16xf32>
    %c54 = arith.constant 54 : index
    %118 = memref.load %arg1[%c54] : memref<108xf32, #tpu.memory_space<smem>>
    %119 = vector.broadcast %118 : f32 to vector<16x16xf32>
    %120 = arith.mulf %119, %24 : vector<16x16xf32>
    %121 = arith.addf %117, %120 : vector<16x16xf32>
    %c55 = arith.constant 55 : index
    %122 = memref.load %arg1[%c55] : memref<108xf32, #tpu.memory_space<smem>>
    %123 = vector.broadcast %122 : f32 to vector<16x16xf32>
    %124 = arith.mulf %123, %25 : vector<16x16xf32>
    %125 = arith.addf %121, %124 : vector<16x16xf32>
    %c56 = arith.constant 56 : index
    %126 = memref.load %arg1[%c56] : memref<108xf32, #tpu.memory_space<smem>>
    %127 = vector.broadcast %126 : f32 to vector<16x16xf32>
    %128 = arith.mulf %127, %26 : vector<16x16xf32>
    %129 = arith.addf %125, %128 : vector<16x16xf32>
    %c57 = arith.constant 57 : index
    %130 = memref.load %arg1[%c57] : memref<108xf32, #tpu.memory_space<smem>>
    %131 = vector.broadcast %130 : f32 to vector<16x16xf32>
    %132 = arith.mulf %131, %27 : vector<16x16xf32>
    %133 = arith.addf %129, %132 : vector<16x16xf32>
    %c58 = arith.constant 58 : index
    %134 = memref.load %arg1[%c58] : memref<108xf32, #tpu.memory_space<smem>>
    %135 = vector.broadcast %134 : f32 to vector<16x16xf32>
    %136 = arith.mulf %135, %28 : vector<16x16xf32>
    %137 = arith.addf %133, %136 : vector<16x16xf32>
    %c59 = arith.constant 59 : index
    %138 = memref.load %arg1[%c59] : memref<108xf32, #tpu.memory_space<smem>>
    %139 = vector.broadcast %138 : f32 to vector<16x16xf32>
    %140 = arith.mulf %139, %29 : vector<16x16xf32>
    %141 = arith.addf %137, %140 : vector<16x16xf32>
    %c60 = arith.constant 60 : index
    %142 = memref.load %arg1[%c60] : memref<108xf32, #tpu.memory_space<smem>>
    %143 = vector.broadcast %142 : f32 to vector<16x16xf32>
    %144 = arith.mulf %143, %30 : vector<16x16xf32>
    %145 = arith.addf %141, %144 : vector<16x16xf32>
    %c61 = arith.constant 61 : index
    %146 = memref.load %arg1[%c61] : memref<108xf32, #tpu.memory_space<smem>>
    %147 = vector.broadcast %146 : f32 to vector<16x16xf32>
    %148 = arith.mulf %147, %31 : vector<16x16xf32>
    %149 = arith.addf %145, %148 : vector<16x16xf32>
    %c62 = arith.constant 62 : index
    %150 = memref.load %arg1[%c62] : memref<108xf32, #tpu.memory_space<smem>>
    %151 = vector.broadcast %150 : f32 to vector<16x16xf32>
    %152 = arith.mulf %151, %32 : vector<16x16xf32>
    %153 = arith.addf %149, %152 : vector<16x16xf32>
    %c81 = arith.constant 81 : index
    %154 = memref.load %arg1[%c81] : memref<108xf32, #tpu.memory_space<smem>>
    %155 = vector.broadcast %154 : f32 to vector<16x16xf32>
    %156 = arith.mulf %155, %35 : vector<16x16xf32>
    %157 = arith.addf %153, %156 : vector<16x16xf32>
    %c82 = arith.constant 82 : index
    %158 = memref.load %arg1[%c82] : memref<108xf32, #tpu.memory_space<smem>>
    %159 = vector.broadcast %158 : f32 to vector<16x16xf32>
    %160 = arith.mulf %159, %36 : vector<16x16xf32>
    %161 = arith.addf %157, %160 : vector<16x16xf32>
    %c83 = arith.constant 83 : index
    %162 = memref.load %arg1[%c83] : memref<108xf32, #tpu.memory_space<smem>>
    %163 = vector.broadcast %162 : f32 to vector<16x16xf32>
    %164 = arith.mulf %163, %37 : vector<16x16xf32>
    %165 = arith.addf %161, %164 : vector<16x16xf32>
    %c84 = arith.constant 84 : index
    %166 = memref.load %arg1[%c84] : memref<108xf32, #tpu.memory_space<smem>>
    %167 = vector.broadcast %166 : f32 to vector<16x16xf32>
    %168 = arith.mulf %167, %38 : vector<16x16xf32>
    %169 = arith.addf %165, %168 : vector<16x16xf32>
    %c85 = arith.constant 85 : index
    %170 = memref.load %arg1[%c85] : memref<108xf32, #tpu.memory_space<smem>>
    %171 = vector.broadcast %170 : f32 to vector<16x16xf32>
    %172 = arith.mulf %171, %39 : vector<16x16xf32>
    %173 = arith.addf %169, %172 : vector<16x16xf32>
    %c86 = arith.constant 86 : index
    %174 = memref.load %arg1[%c86] : memref<108xf32, #tpu.memory_space<smem>>
    %175 = vector.broadcast %174 : f32 to vector<16x16xf32>
    %176 = arith.mulf %175, %40 : vector<16x16xf32>
    %177 = arith.addf %173, %176 : vector<16x16xf32>
    %c87 = arith.constant 87 : index
    %178 = memref.load %arg1[%c87] : memref<108xf32, #tpu.memory_space<smem>>
    %179 = vector.broadcast %178 : f32 to vector<16x16xf32>
    %180 = arith.mulf %179, %41 : vector<16x16xf32>
    %181 = arith.addf %177, %180 : vector<16x16xf32>
    %c88 = arith.constant 88 : index
    %182 = memref.load %arg1[%c88] : memref<108xf32, #tpu.memory_space<smem>>
    %183 = vector.broadcast %182 : f32 to vector<16x16xf32>
    %184 = arith.mulf %183, %42 : vector<16x16xf32>
    %185 = arith.addf %181, %184 : vector<16x16xf32>
    %c89 = arith.constant 89 : index
    %186 = memref.load %arg1[%c89] : memref<108xf32, #tpu.memory_space<smem>>
    %187 = vector.broadcast %186 : f32 to vector<16x16xf32>
    %188 = arith.mulf %187, %43 : vector<16x16xf32>
    %189 = arith.addf %185, %188 : vector<16x16xf32>
    %190 = math.tanh %189 : vector<16x16xf32>
    %c0_17 = arith.constant 0 : index
    %c0_18 = arith.constant 0 : index
    %c0_19 = arith.constant 0 : index
    %c0_20 = arith.constant 0 : index
    %191 = vector.load %arg4[%c0_17, %c0_18, %c0_19, %c0_20] : memref<1x3x16x16xf32, #tpu.memory_space<vmem>>, vector<1x1x16x16xf32>
    %192 = vector.shape_cast %191 : vector<1x1x16x16xf32> to vector<16x16xf32>
    %193 = vector.shape_cast %190 : vector<16x16xf32> to vector<1x1x16x16xf32>
    tpu.vector_store %arg4[%c0_17, %c0_18, %c0_19, %c0_20], %193 {strides = array<i32>} : memref<1x3x16x16xf32, #tpu.memory_space<vmem>>, vector<1x1x16x16xf32>,
    %c1_21 = arith.constant 1 : index
    %194 = memref.load %arg2[%c1_21] : memref<3xf32, #tpu.memory_space<smem>>
    %195 = vector.broadcast %194 : f32 to vector<16x16xf32>
    %c9 = arith.constant 9 : index
    %196 = memref.load %arg1[%c9] : memref<108xf32, #tpu.memory_space<smem>>
    %197 = vector.broadcast %196 : f32 to vector<16x16xf32>
    %198 = arith.mulf %197, %2 : vector<16x16xf32>
    %199 = arith.addf %195, %198 : vector<16x16xf32>
    %c10 = arith.constant 10 : index
    %200 = memref.load %arg1[%c10] : memref<108xf32, #tpu.memory_space<smem>>
    %201 = vector.broadcast %200 : f32 to vector<16x16xf32>
    %202 = arith.mulf %201, %3 : vector<16x16xf32>
    %203 = arith.addf %199, %202 : vector<16x16xf32>
    %c11 = arith.constant 11 : index
    %204 = memref.load %arg1[%c11] : memref<108xf32, #tpu.memory_space<smem>>
    %205 = vector.broadcast %204 : f32 to vector<16x16xf32>
    %206 = arith.mulf %205, %4 : vector<16x16xf32>
    %207 = arith.addf %203, %206 : vector<16x16xf32>
    %c12 = arith.constant 12 : index
    %208 = memref.load %arg1[%c12] : memref<108xf32, #tpu.memory_space<smem>>
    %209 = vector.broadcast %208 : f32 to vector<16x16xf32>
    %210 = arith.mulf %209, %5 : vector<16x16xf32>
    %211 = arith.addf %207, %210 : vector<16x16xf32>
    %c13 = arith.constant 13 : index
    %212 = memref.load %arg1[%c13] : memref<108xf32, #tpu.memory_space<smem>>
    %213 = vector.broadcast %212 : f32 to vector<16x16xf32>
    %214 = arith.mulf %213, %6 : vector<16x16xf32>
    %215 = arith.addf %211, %214 : vector<16x16xf32>
    %c14 = arith.constant 14 : index
    %216 = memref.load %arg1[%c14] : memref<108xf32, #tpu.memory_space<smem>>
    %217 = vector.broadcast %216 : f32 to vector<16x16xf32>
    %218 = arith.mulf %217, %7 : vector<16x16xf32>
    %219 = arith.addf %215, %218 : vector<16x16xf32>
    %c15 = arith.constant 15 : index
    %220 = memref.load %arg1[%c15] : memref<108xf32, #tpu.memory_space<smem>>
    %221 = vector.broadcast %220 : f32 to vector<16x16xf32>
    %222 = arith.mulf %221, %8 : vector<16x16xf32>
    %223 = arith.addf %219, %222 : vector<16x16xf32>
    %c16 = arith.constant 16 : index
    %224 = memref.load %arg1[%c16] : memref<108xf32, #tpu.memory_space<smem>>
    %225 = vector.broadcast %224 : f32 to vector<16x16xf32>
    %226 = arith.mulf %225, %9 : vector<16x16xf32>
    %227 = arith.addf %223, %226 : vector<16x16xf32>
    %c17 = arith.constant 17 : index
    %228 = memref.load %arg1[%c17] : memref<108xf32, #tpu.memory_space<smem>>
    %229 = vector.broadcast %228 : f32 to vector<16x16xf32>
    %230 = arith.mulf %229, %10 : vector<16x16xf32>
    %231 = arith.addf %227, %230 : vector<16x16xf32>
    %c36 = arith.constant 36 : index
    %232 = memref.load %arg1[%c36] : memref<108xf32, #tpu.memory_space<smem>>
    %233 = vector.broadcast %232 : f32 to vector<16x16xf32>
    %234 = arith.mulf %233, %13 : vector<16x16xf32>
    %235 = arith.addf %231, %234 : vector<16x16xf32>
    %c37 = arith.constant 37 : index
    %236 = memref.load %arg1[%c37] : memref<108xf32, #tpu.memory_space<smem>>
    %237 = vector.broadcast %236 : f32 to vector<16x16xf32>
    %238 = arith.mulf %237, %14 : vector<16x16xf32>
    %239 = arith.addf %235, %238 : vector<16x16xf32>
    %c38 = arith.constant 38 : index
    %240 = memref.load %arg1[%c38] : memref<108xf32, #tpu.memory_space<smem>>
    %241 = vector.broadcast %240 : f32 to vector<16x16xf32>
    %242 = arith.mulf %241, %15 : vector<16x16xf32>
    %243 = arith.addf %239, %242 : vector<16x16xf32>
    %c39 = arith.constant 39 : index
    %244 = memref.load %arg1[%c39] : memref<108xf32, #tpu.memory_space<smem>>
    %245 = vector.broadcast %244 : f32 to vector<16x16xf32>
    %246 = arith.mulf %245, %16 : vector<16x16xf32>
    %247 = arith.addf %243, %246 : vector<16x16xf32>
    %c40 = arith.constant 40 : index
    %248 = memref.load %arg1[%c40] : memref<108xf32, #tpu.memory_space<smem>>
    %249 = vector.broadcast %248 : f32 to vector<16x16xf32>
    %250 = arith.mulf %249, %17 : vector<16x16xf32>
    %251 = arith.addf %247, %250 : vector<16x16xf32>
    %c41 = arith.constant 41 : index
    %252 = memref.load %arg1[%c41] : memref<108xf32, #tpu.memory_space<smem>>
    %253 = vector.broadcast %252 : f32 to vector<16x16xf32>
    %254 = arith.mulf %253, %18 : vector<16x16xf32>
    %255 = arith.addf %251, %254 : vector<16x16xf32>
    %c42 = arith.constant 42 : index
    %256 = memref.load %arg1[%c42] : memref<108xf32, #tpu.memory_space<smem>>
    %257 = vector.broadcast %256 : f32 to vector<16x16xf32>
    %258 = arith.mulf %257, %19 : vector<16x16xf32>
    %259 = arith.addf %255, %258 : vector<16x16xf32>
    %c43 = arith.constant 43 : index
    %260 = memref.load %arg1[%c43] : memref<108xf32, #tpu.memory_space<smem>>
    %261 = vector.broadcast %260 : f32 to vector<16x16xf32>
    %262 = arith.mulf %261, %20 : vector<16x16xf32>
    %263 = arith.addf %259, %262 : vector<16x16xf32>
    %c44 = arith.constant 44 : index
    %264 = memref.load %arg1[%c44] : memref<108xf32, #tpu.memory_space<smem>>
    %265 = vector.broadcast %264 : f32 to vector<16x16xf32>
    %266 = arith.mulf %265, %21 : vector<16x16xf32>
    %267 = arith.addf %263, %266 : vector<16x16xf32>
    %c63 = arith.constant 63 : index
    %268 = memref.load %arg1[%c63] : memref<108xf32, #tpu.memory_space<smem>>
    %269 = vector.broadcast %268 : f32 to vector<16x16xf32>
    %270 = arith.mulf %269, %24 : vector<16x16xf32>
    %271 = arith.addf %267, %270 : vector<16x16xf32>
    %c64 = arith.constant 64 : index
    %272 = memref.load %arg1[%c64] : memref<108xf32, #tpu.memory_space<smem>>
    %273 = vector.broadcast %272 : f32 to vector<16x16xf32>
    %274 = arith.mulf %273, %25 : vector<16x16xf32>
    %275 = arith.addf %271, %274 : vector<16x16xf32>
    %c65 = arith.constant 65 : index
    %276 = memref.load %arg1[%c65] : memref<108xf32, #tpu.memory_space<smem>>
    %277 = vector.broadcast %276 : f32 to vector<16x16xf32>
    %278 = arith.mulf %277, %26 : vector<16x16xf32>
    %279 = arith.addf %275, %278 : vector<16x16xf32>
    %c66 = arith.constant 66 : index
    %280 = memref.load %arg1[%c66] : memref<108xf32, #tpu.memory_space<smem>>
    %281 = vector.broadcast %280 : f32 to vector<16x16xf32>
    %282 = arith.mulf %281, %27 : vector<16x16xf32>
    %283 = arith.addf %279, %282 : vector<16x16xf32>
    %c67 = arith.constant 67 : index
    %284 = memref.load %arg1[%c67] : memref<108xf32, #tpu.memory_space<smem>>
    %285 = vector.broadcast %284 : f32 to vector<16x16xf32>
    %286 = arith.mulf %285, %28 : vector<16x16xf32>
    %287 = arith.addf %283, %286 : vector<16x16xf32>
    %c68 = arith.constant 68 : index
    %288 = memref.load %arg1[%c68] : memref<108xf32, #tpu.memory_space<smem>>
    %289 = vector.broadcast %288 : f32 to vector<16x16xf32>
    %290 = arith.mulf %289, %29 : vector<16x16xf32>
    %291 = arith.addf %287, %290 : vector<16x16xf32>
    %c69 = arith.constant 69 : index
    %292 = memref.load %arg1[%c69] : memref<108xf32, #tpu.memory_space<smem>>
    %293 = vector.broadcast %292 : f32 to vector<16x16xf32>
    %294 = arith.mulf %293, %30 : vector<16x16xf32>
    %295 = arith.addf %291, %294 : vector<16x16xf32>
    %c70 = arith.constant 70 : index
    %296 = memref.load %arg1[%c70] : memref<108xf32, #tpu.memory_space<smem>>
    %297 = vector.broadcast %296 : f32 to vector<16x16xf32>
    %298 = arith.mulf %297, %31 : vector<16x16xf32>
    %299 = arith.addf %295, %298 : vector<16x16xf32>
    %c71 = arith.constant 71 : index
    %300 = memref.load %arg1[%c71] : memref<108xf32, #tpu.memory_space<smem>>
    %301 = vector.broadcast %300 : f32 to vector<16x16xf32>
    %302 = arith.mulf %301, %32 : vector<16x16xf32>
    %303 = arith.addf %299, %302 : vector<16x16xf32>
    %c90 = arith.constant 90 : index
    %304 = memref.load %arg1[%c90] : memref<108xf32, #tpu.memory_space<smem>>
    %305 = vector.broadcast %304 : f32 to vector<16x16xf32>
    %306 = arith.mulf %305, %35 : vector<16x16xf32>
    %307 = arith.addf %303, %306 : vector<16x16xf32>
    %c91 = arith.constant 91 : index
    %308 = memref.load %arg1[%c91] : memref<108xf32, #tpu.memory_space<smem>>
    %309 = vector.broadcast %308 : f32 to vector<16x16xf32>
    %310 = arith.mulf %309, %36 : vector<16x16xf32>
    %311 = arith.addf %307, %310 : vector<16x16xf32>
    %c92 = arith.constant 92 : index
    %312 = memref.load %arg1[%c92] : memref<108xf32, #tpu.memory_space<smem>>
    %313 = vector.broadcast %312 : f32 to vector<16x16xf32>
    %314 = arith.mulf %313, %37 : vector<16x16xf32>
    %315 = arith.addf %311, %314 : vector<16x16xf32>
    %c93 = arith.constant 93 : index
    %316 = memref.load %arg1[%c93] : memref<108xf32, #tpu.memory_space<smem>>
    %317 = vector.broadcast %316 : f32 to vector<16x16xf32>
    %318 = arith.mulf %317, %38 : vector<16x16xf32>
    %319 = arith.addf %315, %318 : vector<16x16xf32>
    %c94 = arith.constant 94 : index
    %320 = memref.load %arg1[%c94] : memref<108xf32, #tpu.memory_space<smem>>
    %321 = vector.broadcast %320 : f32 to vector<16x16xf32>
    %322 = arith.mulf %321, %39 : vector<16x16xf32>
    %323 = arith.addf %319, %322 : vector<16x16xf32>
    %c95 = arith.constant 95 : index
    %324 = memref.load %arg1[%c95] : memref<108xf32, #tpu.memory_space<smem>>
    %325 = vector.broadcast %324 : f32 to vector<16x16xf32>
    %326 = arith.mulf %325, %40 : vector<16x16xf32>
    %327 = arith.addf %323, %326 : vector<16x16xf32>
    %c96 = arith.constant 96 : index
    %328 = memref.load %arg1[%c96] : memref<108xf32, #tpu.memory_space<smem>>
    %329 = vector.broadcast %328 : f32 to vector<16x16xf32>
    %330 = arith.mulf %329, %41 : vector<16x16xf32>
    %331 = arith.addf %327, %330 : vector<16x16xf32>
    %c97 = arith.constant 97 : index
    %332 = memref.load %arg1[%c97] : memref<108xf32, #tpu.memory_space<smem>>
    %333 = vector.broadcast %332 : f32 to vector<16x16xf32>
    %334 = arith.mulf %333, %42 : vector<16x16xf32>
    %335 = arith.addf %331, %334 : vector<16x16xf32>
    %c98 = arith.constant 98 : index
    %336 = memref.load %arg1[%c98] : memref<108xf32, #tpu.memory_space<smem>>
    %337 = vector.broadcast %336 : f32 to vector<16x16xf32>
    %338 = arith.mulf %337, %43 : vector<16x16xf32>
    %339 = arith.addf %335, %338 : vector<16x16xf32>
    %340 = math.tanh %339 : vector<16x16xf32>
    %c0_22 = arith.constant 0 : index
    %c1_23 = arith.constant 1 : index
    %c0_24 = arith.constant 0 : index
    %c0_25 = arith.constant 0 : index
    %341 = vector.load %arg4[%c0_22, %c1_23, %c0_24, %c0_25] : memref<1x3x16x16xf32, #tpu.memory_space<vmem>>, vector<1x1x16x16xf32>
    %342 = vector.shape_cast %341 : vector<1x1x16x16xf32> to vector<16x16xf32>
    %343 = vector.shape_cast %340 : vector<16x16xf32> to vector<1x1x16x16xf32>
    tpu.vector_store %arg4[%c0_22, %c1_23, %c0_24, %c0_25], %343 {strides = array<i32>} : memref<1x3x16x16xf32, #tpu.memory_space<vmem>>, vector<1x1x16x16xf32>,
    %c2_26 = arith.constant 2 : index
    %344 = memref.load %arg2[%c2_26] : memref<3xf32, #tpu.memory_space<smem>>
    %345 = vector.broadcast %344 : f32 to vector<16x16xf32>
    %c18 = arith.constant 18 : index
    %346 = memref.load %arg1[%c18] : memref<108xf32, #tpu.memory_space<smem>>
    %347 = vector.broadcast %346 : f32 to vector<16x16xf32>
    %348 = arith.mulf %347, %2 : vector<16x16xf32>
    %349 = arith.addf %345, %348 : vector<16x16xf32>
    %c19 = arith.constant 19 : index
    %350 = memref.load %arg1[%c19] : memref<108xf32, #tpu.memory_space<smem>>
    %351 = vector.broadcast %350 : f32 to vector<16x16xf32>
    %352 = arith.mulf %351, %3 : vector<16x16xf32>
    %353 = arith.addf %349, %352 : vector<16x16xf32>
    %c20 = arith.constant 20 : index
    %354 = memref.load %arg1[%c20] : memref<108xf32, #tpu.memory_space<smem>>
    %355 = vector.broadcast %354 : f32 to vector<16x16xf32>
    %356 = arith.mulf %355, %4 : vector<16x16xf32>
    %357 = arith.addf %353, %356 : vector<16x16xf32>
    %c21 = arith.constant 21 : index
    %358 = memref.load %arg1[%c21] : memref<108xf32, #tpu.memory_space<smem>>
    %359 = vector.broadcast %358 : f32 to vector<16x16xf32>
    %360 = arith.mulf %359, %5 : vector<16x16xf32>
    %361 = arith.addf %357, %360 : vector<16x16xf32>
    %c22 = arith.constant 22 : index
    %362 = memref.load %arg1[%c22] : memref<108xf32, #tpu.memory_space<smem>>
    %363 = vector.broadcast %362 : f32 to vector<16x16xf32>
    %364 = arith.mulf %363, %6 : vector<16x16xf32>
    %365 = arith.addf %361, %364 : vector<16x16xf32>
    %c23 = arith.constant 23 : index
    %366 = memref.load %arg1[%c23] : memref<108xf32, #tpu.memory_space<smem>>
    %367 = vector.broadcast %366 : f32 to vector<16x16xf32>
    %368 = arith.mulf %367, %7 : vector<16x16xf32>
    %369 = arith.addf %365, %368 : vector<16x16xf32>
    %c24 = arith.constant 24 : index
    %370 = memref.load %arg1[%c24] : memref<108xf32, #tpu.memory_space<smem>>
    %371 = vector.broadcast %370 : f32 to vector<16x16xf32>
    %372 = arith.mulf %371, %8 : vector<16x16xf32>
    %373 = arith.addf %369, %372 : vector<16x16xf32>
    %c25 = arith.constant 25 : index
    %374 = memref.load %arg1[%c25] : memref<108xf32, #tpu.memory_space<smem>>
    %375 = vector.broadcast %374 : f32 to vector<16x16xf32>
    %376 = arith.mulf %375, %9 : vector<16x16xf32>
    %377 = arith.addf %373, %376 : vector<16x16xf32>
    %c26 = arith.constant 26 : index
    %378 = memref.load %arg1[%c26] : memref<108xf32, #tpu.memory_space<smem>>
    %379 = vector.broadcast %378 : f32 to vector<16x16xf32>
    %380 = arith.mulf %379, %10 : vector<16x16xf32>
    %381 = arith.addf %377, %380 : vector<16x16xf32>
    %c45 = arith.constant 45 : index
    %382 = memref.load %arg1[%c45] : memref<108xf32, #tpu.memory_space<smem>>
    %383 = vector.broadcast %382 : f32 to vector<16x16xf32>
    %384 = arith.mulf %383, %13 : vector<16x16xf32>
    %385 = arith.addf %381, %384 : vector<16x16xf32>
    %c46 = arith.constant 46 : index
    %386 = memref.load %arg1[%c46] : memref<108xf32, #tpu.memory_space<smem>>
    %387 = vector.broadcast %386 : f32 to vector<16x16xf32>
    %388 = arith.mulf %387, %14 : vector<16x16xf32>
    %389 = arith.addf %385, %388 : vector<16x16xf32>
    %c47 = arith.constant 47 : index
    %390 = memref.load %arg1[%c47] : memref<108xf32, #tpu.memory_space<smem>>
    %391 = vector.broadcast %390 : f32 to vector<16x16xf32>
    %392 = arith.mulf %391, %15 : vector<16x16xf32>
    %393 = arith.addf %389, %392 : vector<16x16xf32>
    %c48 = arith.constant 48 : index
    %394 = memref.load %arg1[%c48] : memref<108xf32, #tpu.memory_space<smem>>
    %395 = vector.broadcast %394 : f32 to vector<16x16xf32>
    %396 = arith.mulf %395, %16 : vector<16x16xf32>
    %397 = arith.addf %393, %396 : vector<16x16xf32>
    %c49 = arith.constant 49 : index
    %398 = memref.load %arg1[%c49] : memref<108xf32, #tpu.memory_space<smem>>
    %399 = vector.broadcast %398 : f32 to vector<16x16xf32>
    %400 = arith.mulf %399, %17 : vector<16x16xf32>
    %401 = arith.addf %397, %400 : vector<16x16xf32>
    %c50 = arith.constant 50 : index
    %402 = memref.load %arg1[%c50] : memref<108xf32, #tpu.memory_space<smem>>
    %403 = vector.broadcast %402 : f32 to vector<16x16xf32>
    %404 = arith.mulf %403, %18 : vector<16x16xf32>
    %405 = arith.addf %401, %404 : vector<16x16xf32>
    %c51 = arith.constant 51 : index
    %406 = memref.load %arg1[%c51] : memref<108xf32, #tpu.memory_space<smem>>
    %407 = vector.broadcast %406 : f32 to vector<16x16xf32>
    %408 = arith.mulf %407, %19 : vector<16x16xf32>
    %409 = arith.addf %405, %408 : vector<16x16xf32>
    %c52 = arith.constant 52 : index
    %410 = memref.load %arg1[%c52] : memref<108xf32, #tpu.memory_space<smem>>
    %411 = vector.broadcast %410 : f32 to vector<16x16xf32>
    %412 = arith.mulf %411, %20 : vector<16x16xf32>
    %413 = arith.addf %409, %412 : vector<16x16xf32>
    %c53 = arith.constant 53 : index
    %414 = memref.load %arg1[%c53] : memref<108xf32, #tpu.memory_space<smem>>
    %415 = vector.broadcast %414 : f32 to vector<16x16xf32>
    %416 = arith.mulf %415, %21 : vector<16x16xf32>
    %417 = arith.addf %413, %416 : vector<16x16xf32>
    %c72 = arith.constant 72 : index
    %418 = memref.load %arg1[%c72] : memref<108xf32, #tpu.memory_space<smem>>
    %419 = vector.broadcast %418 : f32 to vector<16x16xf32>
    %420 = arith.mulf %419, %24 : vector<16x16xf32>
    %421 = arith.addf %417, %420 : vector<16x16xf32>
    %c73 = arith.constant 73 : index
    %422 = memref.load %arg1[%c73] : memref<108xf32, #tpu.memory_space<smem>>
    %423 = vector.broadcast %422 : f32 to vector<16x16xf32>
    %424 = arith.mulf %423, %25 : vector<16x16xf32>
    %425 = arith.addf %421, %424 : vector<16x16xf32>
    %c74 = arith.constant 74 : index
    %426 = memref.load %arg1[%c74] : memref<108xf32, #tpu.memory_space<smem>>
    %427 = vector.broadcast %426 : f32 to vector<16x16xf32>
    %428 = arith.mulf %427, %26 : vector<16x16xf32>
    %429 = arith.addf %425, %428 : vector<16x16xf32>
    %c75 = arith.constant 75 : index
    %430 = memref.load %arg1[%c75] : memref<108xf32, #tpu.memory_space<smem>>
    %431 = vector.broadcast %430 : f32 to vector<16x16xf32>
    %432 = arith.mulf %431, %27 : vector<16x16xf32>
    %433 = arith.addf %429, %432 : vector<16x16xf32>
    %c76 = arith.constant 76 : index
    %434 = memref.load %arg1[%c76] : memref<108xf32, #tpu.memory_space<smem>>
    %435 = vector.broadcast %434 : f32 to vector<16x16xf32>
    %436 = arith.mulf %435, %28 : vector<16x16xf32>
    %437 = arith.addf %433, %436 : vector<16x16xf32>
    %c77 = arith.constant 77 : index
    %438 = memref.load %arg1[%c77] : memref<108xf32, #tpu.memory_space<smem>>
    %439 = vector.broadcast %438 : f32 to vector<16x16xf32>
    %440 = arith.mulf %439, %29 : vector<16x16xf32>
    %441 = arith.addf %437, %440 : vector<16x16xf32>
    %c78 = arith.constant 78 : index
    %442 = memref.load %arg1[%c78] : memref<108xf32, #tpu.memory_space<smem>>
    %443 = vector.broadcast %442 : f32 to vector<16x16xf32>
    %444 = arith.mulf %443, %30 : vector<16x16xf32>
    %445 = arith.addf %441, %444 : vector<16x16xf32>
    %c79 = arith.constant 79 : index
    %446 = memref.load %arg1[%c79] : memref<108xf32, #tpu.memory_space<smem>>
    %447 = vector.broadcast %446 : f32 to vector<16x16xf32>
    %448 = arith.mulf %447, %31 : vector<16x16xf32>
    %449 = arith.addf %445, %448 : vector<16x16xf32>
    %c80 = arith.constant 80 : index
    %450 = memref.load %arg1[%c80] : memref<108xf32, #tpu.memory_space<smem>>
    %451 = vector.broadcast %450 : f32 to vector<16x16xf32>
    %452 = arith.mulf %451, %32 : vector<16x16xf32>
    %453 = arith.addf %449, %452 : vector<16x16xf32>
    %c99 = arith.constant 99 : index
    %454 = memref.load %arg1[%c99] : memref<108xf32, #tpu.memory_space<smem>>
    %455 = vector.broadcast %454 : f32 to vector<16x16xf32>
    %456 = arith.mulf %455, %35 : vector<16x16xf32>
    %457 = arith.addf %453, %456 : vector<16x16xf32>
    %c100 = arith.constant 100 : index
    %458 = memref.load %arg1[%c100] : memref<108xf32, #tpu.memory_space<smem>>
    %459 = vector.broadcast %458 : f32 to vector<16x16xf32>
    %460 = arith.mulf %459, %36 : vector<16x16xf32>
    %461 = arith.addf %457, %460 : vector<16x16xf32>
    %c101 = arith.constant 101 : index
    %462 = memref.load %arg1[%c101] : memref<108xf32, #tpu.memory_space<smem>>
    %463 = vector.broadcast %462 : f32 to vector<16x16xf32>
    %464 = arith.mulf %463, %37 : vector<16x16xf32>
    %465 = arith.addf %461, %464 : vector<16x16xf32>
    %c102 = arith.constant 102 : index
    %466 = memref.load %arg1[%c102] : memref<108xf32, #tpu.memory_space<smem>>
    %467 = vector.broadcast %466 : f32 to vector<16x16xf32>
    %468 = arith.mulf %467, %38 : vector<16x16xf32>
    %469 = arith.addf %465, %468 : vector<16x16xf32>
    %c103 = arith.constant 103 : index
    %470 = memref.load %arg1[%c103] : memref<108xf32, #tpu.memory_space<smem>>
    %471 = vector.broadcast %470 : f32 to vector<16x16xf32>
    %472 = arith.mulf %471, %39 : vector<16x16xf32>
    %473 = arith.addf %469, %472 : vector<16x16xf32>
    %c104 = arith.constant 104 : index
    %474 = memref.load %arg1[%c104] : memref<108xf32, #tpu.memory_space<smem>>
    %475 = vector.broadcast %474 : f32 to vector<16x16xf32>
    %476 = arith.mulf %475, %40 : vector<16x16xf32>
    %477 = arith.addf %473, %476 : vector<16x16xf32>
    %c105 = arith.constant 105 : index
    %478 = memref.load %arg1[%c105] : memref<108xf32, #tpu.memory_space<smem>>
    %479 = vector.broadcast %478 : f32 to vector<16x16xf32>
    %480 = arith.mulf %479, %41 : vector<16x16xf32>
    %481 = arith.addf %477, %480 : vector<16x16xf32>
    %c106 = arith.constant 106 : index
    %482 = memref.load %arg1[%c106] : memref<108xf32, #tpu.memory_space<smem>>
    %483 = vector.broadcast %482 : f32 to vector<16x16xf32>
    %484 = arith.mulf %483, %42 : vector<16x16xf32>
    %485 = arith.addf %481, %484 : vector<16x16xf32>
    %c107 = arith.constant 107 : index
    %486 = memref.load %arg1[%c107] : memref<108xf32, #tpu.memory_space<smem>>
    %487 = vector.broadcast %486 : f32 to vector<16x16xf32>
    %488 = arith.mulf %487, %43 : vector<16x16xf32>
    %489 = arith.addf %485, %488 : vector<16x16xf32>
    %490 = math.tanh %489 : vector<16x16xf32>
    %c0_27 = arith.constant 0 : index
    %c2_28 = arith.constant 2 : index
    %c0_29 = arith.constant 0 : index
    %c0_30 = arith.constant 0 : index
    %491 = vector.load %arg4[%c0_27, %c2_28, %c0_29, %c0_30] : memref<1x3x16x16xf32, #tpu.memory_space<vmem>>, vector<1x1x16x16xf32>
    %492 = vector.shape_cast %491 : vector<1x1x16x16xf32> to vector<16x16xf32>
    %493 = vector.shape_cast %490 : vector<16x16xf32> to vector<1x1x16x16xf32>
    tpu.vector_store %arg4[%c0_27, %c2_28, %c0_29, %c0_30], %493 {strides = array<i32>} : memref<1x3x16x16xf32, #tpu.memory_space<vmem>>, vector<1x1x16x16xf32>,
    return
  }
  func.func @transform_0(%arg0: i32) -> i32 {
    %c0_i32 = arith.constant 0 : i32
    %c0_i32_0 = arith.constant 0 : i32
    return %c0_i32 : i32
  }
  func.func @transform_1(%arg0: i32) -> i32 {
    %c0_i32 = arith.constant 0 : i32
    %c0_i32_0 = arith.constant 0 : i32
    return %c0_i32 : i32
  }
  func.func @transform_2(%arg0: i32) -> (i32, i32, i32, i32) {
    %c0_i32 = arith.constant 0 : i32
    %c0_i32_0 = arith.constant 0 : i32
    %c0_i32_1 = arith.constant 0 : i32
    %c0_i32_2 = arith.constant 0 : i32
    return %arg0, %c0_i32, %c0_i32_0, %c0_i32_1 : i32, i32, i32, i32
  }
  func.func @transform_3(%arg0: i32) -> (i32, i32, i32, i32) {
    %c0_i32 = arith.constant 0 : i32
    %c0_i32_0 = arith.constant 0 : i32
    %c0_i32_1 = arith.constant 0 : i32
    %c0_i32_2 = arith.constant 0 : i32
    return %arg0, %c0_i32, %c0_i32_0, %c0_i32_1 : i32, i32, i32, i32
  }
}

</mosaic_0001>

<llo_original>
// kernel: tpu_custom_call.1
$region0: #{tpu_custom_call.1}
  #allocation0 [shape = 'u32[]', space=smem, size = 0x4, offset = 0x4, fixed_abs, tag = 'smem constant byte address 0x4 - core index']
  #allocation1 [shape = 'u32[72,128]{1,0:T(1,128)}', space=vmem, size = 0x9000, scoped, tag = 'internal scratch']
  %s0 = inlined_call_operand.vmem [shape: f32[108], index: 0, kind: input, shape index: {}]
  %s1 = inlined_call_operand.vmem [shape: f32[3], index: 1, kind: input, shape index: {}]
  %s2 = inlined_call_operand.vmem [shape: f32[2,4,18,18], index: 2, kind: input, shape index: {}]
  %s3 = inlined_call_operand.hbm [shape: f32[2,3,16,16], index: 3, kind: output, shape index: {}]
  %s4 = sld [smem:[#allocation0]]
  $region53: #{tpu_custom_call.1} parent=0
    _
  %s6 = ssub.s32 1, %s4
  %s7 = scalar_select 0, %s6, %s4
  $region1: #{tpu_custom_call.1} parent=0
    #allocation2 [shape = 'u8[512]{0}', space=smem, size = 0x200, scoped, tag = 'input window, operand 0, single buffered']
    #allocation3 [shape = 's32[2]{0}', space=sflag, size = 0x8, scoped, tag = 'scoped memory for tpu_custom_call.1']
    #allocation4 [shape = 's32[2]{0}', space=sflag, size = 0x8, scoped, tag = 'scoped memory for tpu_custom_call.1']
    #allocation5 [shape = 'u8[512]{0}', space=smem, size = 0x200, scoped, tag = 'input window, operand 1, single buffered']
    #allocation6 [shape = 's32[1]{0}', space=sflag, size = 0x4, scoped, tag = 'scoped memory for tpu_custom_call.1']
    #allocation7 [shape = 'u8[49152]{0}', space=vmem, size = 0xc000, scoped, tag = 'output window, operand 0']
    %8 = vsyncpa [#allocation4], 0
    %9 = vsyncpa [#allocation6], 0
    %10 = vsyncpa [#allocation3], 0
    %s11 = scalar_lea.sflag [#allocation3], 1
    %12 = vsyncpa %s11, 0
    loop: start=0, step=1, limit=4
    $region2: #{tpu_custom_call.1} parent=1 // loop_pre_header
      _
    $region3: #{tpu_custom_call.1} parent=1 // loop_header
      %s14 = sphi 0, %s18
      %p15 = scmp.ge.s32.totalorder %s14, 4
      %s22 = sphi 0, %s22
      %s24 = sphi 0, %s22
      %s25 = sphi 0, %s24
      %s39 = sphi 0, %s25
      %s43 = sphi 0, %s43
      %s45 = sphi 0, %s43
      %s46 = sphi 0, %s45
      %s60 = sphi 0, %s46
      %s66 = sphi 0, %s68
      %s69 = sphi 0, %s66
      %s70 = sphi 0, %s69
      %s86 = sphi 0, %s70
      %s92 = sphi 0, %s94
      %s95 = sphi 0, %s92
      %s96 = sphi 0, %s95
      %s112 = sphi 0, %s96
    $region4: #{tpu_custom_call.1} parent=1 // loop_header_branch
      %17 = sbr.rel (%p15) target = $region8
    $region5: #{tpu_custom_call.1} parent=1 // loop_body
      %s19 = ssub.s32 %s14, 1
      %s20 = ssub.s32 %s14, 2
      %s21 = sadd.s32 %s14, 1
      %s23 = sadd.s32 %s22, 1
      %p26 = scmp.eq.s32.totalorder %s14, 1
      %p27 = scmp.ne.s32.totalorder %s22, %s24
      %p28 = scmp.eq.s32.totalorder %s14, 0
      %p29 = por %p27, %p28
      %p30 = scmp.ne.s32.totalorder %s22, %s24
      %p31 = scmp.eq.s32.totalorder %s19, 1
      %p32 = por %p30, %p31
      %p33 = scmp.ne.s32.totalorder %s24, %s25
      %p34 = scmp.eq.s32.totalorder %s19, 0
      %p35 = por %p33, %p34
      %p36 = scmp.ne.s32.totalorder %s24, %s25
      %p37 = scmp.eq.s32.totalorder %s20, 1
      %p38 = por %p36, %p37
      %p40 = scmp.ne.s32.totalorder %s25, %s39
      %p41 = scmp.eq.s32.totalorder %s20, 0
      %p42 = por %p40, %p41
      %s44 = sadd.s32 %s43, 1
      %p47 = scmp.eq.s32.totalorder %s14, 1
      %p48 = scmp.ne.s32.totalorder %s43, %s45
      %p49 = scmp.eq.s32.totalorder %s14, 0
      %p50 = por %p48, %p49
      %p51 = scmp.ne.s32.totalorder %s43, %s45
      %p52 = scmp.eq.s32.totalorder %s19, 1
      %p53 = por %p51, %p52
      %p54 = scmp.ne.s32.totalorder %s45, %s46
      %p55 = scmp.eq.s32.totalorder %s19, 0
      %p56 = por %p54, %p55
      %p57 = scmp.ne.s32.totalorder %s45, %s46
      %p58 = scmp.eq.s32.totalorder %s20, 1
      %p59 = por %p57, %p58
      %p61 = scmp.ne.s32.totalorder %s46, %s60
      %p62 = scmp.eq.s32.totalorder %s20, 0
      %p63 = por %p61, %p62
      %s64 = ssub.s32 %s14, %s21
      %p65 = scmp.eq.s32.totalorder %s64, 0
      %s67 = sadd.s32 %s66, 1
      %s68 = scalar_select %p65, %s66, %s67
      %p71 = pneg %p65
      %p72 = scmp.eq.s32.totalorder %s14, 1
      %p73 = por %p71, %p72
      %p74 = scmp.ne.s32.totalorder %s66, %s69
      %p75 = scmp.eq.s32.totalorder %s14, 0
      %p76 = por %p74, %p75
      %p77 = scmp.ne.s32.totalorder %s66, %s69
      %p78 = scmp.eq.s32.totalorder %s19, 1
      %p79 = por %p77, %p78
      %p80 = scmp.ne.s32.totalorder %s69, %s70
      %p81 = scmp.eq.s32.totalorder %s19, 0
      %p82 = por %p80, %p81
      %p83 = scmp.ne.s32.totalorder %s69, %s70
      %p84 = scmp.eq.s32.totalorder %s20, 1
      %p85 = por %p83, %p84
      %p87 = scmp.ne.s32.totalorder %s70, %s86
      %p88 = scmp.eq.s32.totalorder %s20, 0
      %p89 = por %p87, %p88
      %s90 = ssub.s32 %s14, %s21
      %p91 = scmp.eq.s32.totalorder %s90, 0
      %s93 = sadd.s32 %s92, 1
      %s94 = scalar_select %p91, %s92, %s93
      %p97 = pneg %p91
      %p98 = scmp.eq.s32.totalorder %s14, 1
      %p99 = por %p97, %p98
      %p100 = scmp.ne.s32.totalorder %s92, %s95
      %p101 = scmp.eq.s32.totalorder %s14, 0
      %p102 = por %p100, %p101
      %p103 = scmp.ne.s32.totalorder %s92, %s95
      %p104 = scmp.eq.s32.totalorder %s19, 1
      %p105 = por %p103, %p104
      %p106 = scmp.ne.s32.totalorder %s95, %s96
      %p107 = scmp.eq.s32.totalorder %s19, 0
      %p108 = por %p106, %p107
      %p109 = scmp.ne.s32.totalorder %s95, %s96
      %p110 = scmp.eq.s32.totalorder %s20, 1
      %p111 = por %p109, %p110
      %p113 = scmp.ne.s32.totalorder %s96, %s112
      %p114 = scmp.eq.s32.totalorder %s20, 0
      %p115 = por %p113, %p114
      %p116 = scmp.le.s32.totalorder 1, %s14
      %p117 = scmp.lt.s32.totalorder %s14, 3
      %p118 = pnand %p116, %p117
      %p119 = pneg %p118
      // Predicated region
      $region9: #{tpu_custom_call.1} parent=5 // pred_check
        _
      $region10: #{tpu_custom_call.1} parent=5 // pred_check_branch
        %121 = sbr.rel (%p118) target = $region12
      $region11: #{tpu_custom_call.1} parent=5 // pred_region
        %s122 = ssub.s32 %s14, 1
        // Predicated region
        $region13: #{tpu_custom_call.1} parent=11 // pred_check
          %p123 = pneg %p35
        $region14: #{tpu_custom_call.1} parent=11 // pred_check_branch
          %125 = sbr.rel (%p123) target = $region16
        $region15: #{tpu_custom_call.1} parent=11 // pred_region
          %127 = vsyncadd [#allocation4], 0
          %s129 = sshll.u32 %s0, 4
          %s130 = int_to_ptr.vmem [resolvable:$true] %s129
          %132 = dma.vmem_to_smem %s130, 16, [#allocation2], [#allocation4]
        $region16: #{tpu_custom_call.1} parent=11 // pred_fallthru
          _
        // Predicated region
        $region17: #{tpu_custom_call.1} parent=11 // pred_check
          %p133 = pneg %p56
        $region18: #{tpu_custom_call.1} parent=11 // pred_check_branch
          %135 = sbr.rel (%p133) target = $region20
        $region19: #{tpu_custom_call.1} parent=11 // pred_region
          %137 = vsyncadd [#allocation6], 0
          %s139 = sshll.u32 %s1, 4
          %s140 = int_to_ptr.vmem [resolvable:$true] %s139
          %142 = dma.vmem_to_smem %s140, 16, [#allocation5], [#allocation6]
        $region20: #{tpu_custom_call.1} parent=11 // pred_fallthru
          _
      $region12: #{tpu_custom_call.1} parent=5 // pred_fallthru
        _
      %p143 = scmp.lt.s32.totalorder %s14, 2
      // Predicated region
      $region21: #{tpu_custom_call.1} parent=5 // pred_check
        %p144 = pneg %p143
      $region22: #{tpu_custom_call.1} parent=5 // pred_check_branch
        %146 = sbr.rel (%p144) target = $region24
      $region23: #{tpu_custom_call.1} parent=5 // pred_region
        // Predicated region
        $region25: #{tpu_custom_call.1} parent=23 // pred_check
          %p147 = pneg %p76
        $region26: #{tpu_custom_call.1} parent=23 // pred_check_branch
          %149 = sbr.rel (%p147) target = $region28
        $region27: #{tpu_custom_call.1} parent=23 // pred_region
          %p150 = scmp.lt.s32.totalorder %s14, 1
          %s151 = scalar_select %p150, %s14, 1
          %s152 = smul.addr %s151, 12
          %s153 = smul.addr %s152, 8
          %s154 = scalar_lea.vmem %s2, %s153
        $region28: #{tpu_custom_call.1} parent=23 // pred_fallthru
          _
      $region24: #{tpu_custom_call.1} parent=5 // pred_fallthru
        _
      %p155 = scmp.le.s32.totalorder 1, %s14
      %p156 = scmp.lt.s32.totalorder %s14, 3
      %p157 = pnand %p155, %p156
      %p158 = pneg %p157
      // Predicated region
      $region29: #{tpu_custom_call.1} parent=5 // pred_check
        _
      $region30: #{tpu_custom_call.1} parent=5 // pred_check_branch
        %160 = sbr.rel (%p157) target = $region32
      $region31: #{tpu_custom_call.1} parent=5 // pred_region
        %s161 = ssub.s32 %s14, 1
        // Predicated region
        $region33: #{tpu_custom_call.1} parent=31 // pred_check
          %p162 = pneg %p35
        $region34: #{tpu_custom_call.1} parent=31 // pred_check_branch
          %164 = sbr.rel (%p162) target = $region36
        $region35: #{tpu_custom_call.1} parent=31 // pred_region
          %166 = dma.done [#allocation4], 16
        $region36: #{tpu_custom_call.1} parent=31 // pred_fallthru
          _
        // Predicated region
        $region37: #{tpu_custom_call.1} parent=31 // pred_check
          %p167 = pneg %p56
        $region38: #{tpu_custom_call.1} parent=31 // pred_check_branch
          %169 = sbr.rel (%p167) target = $region40
        $region39: #{tpu_custom_call.1} parent=31 // pred_region
          %171 = dma.done [#allocation6], 16
        $region40: #{tpu_custom_call.1} parent=31 // pred_fallthru
          _
        %172 = sfence
        %p173 = pneg %p35
        %p174 = pneg %p32
        %p175 = pneg %p56
        %p176 = pneg %p53
        %p177 = scmp.lt.s32.totalorder %s19, 1
        %s178 = scalar_select %p177, %s19, 1
        %s179 = smul.addr %s178, 12
        %s180 = smul.addr %s179, 8
        %s181 = scalar_lea.vmem %s2, %s180
        %p182 = pneg %p82
        %p183 = pneg %p79
        %p184 = pneg %p108
        %p185 = pneg %p105
        %s186 = sand.u32 %s95, 1
        %s187 = scalar_lea.sflag [#allocation3], %s186
        %s188 = sand.u32 %s95, 1
        %s189 = smul.addr %s188, 48
        %s190 = scalar_lea.vmem [#allocation7], %s189
        %p191 = scmp.lt.s32.totalorder %s19, 1
        %s192 = scalar_select %p191, %s19, 1
        %s193 = smul.addr %s192, 12
        %s194 = smul.addr %s193, 8
        %s195 = scalar_lea.vmem %s2, %s194
        %v196 = vld [vmem:[%s195] sm:$0xff]
        %v197 = vld [vmem:[%s195 + $0x8] sm:$0xff]
        %v198 = vld [vmem:[%s195 + $0x10] sm:$0x3]
        %s199 = scalar_lea.vmem %s195, 24
        %v200 = vld [vmem:[%s199] sm:$0xff]
        %v201 = vld [vmem:[%s199 + $0x8] sm:$0xff]
        %v202 = vld [vmem:[%s199 + $0x10] sm:$0x3]
        %s203 = scalar_lea.vmem %s195, 48
        %v204 = vld [vmem:[%s203] sm:$0xff]
        %v205 = vld [vmem:[%s203 + $0x8] sm:$0xff]
        %v206 = vld [vmem:[%s203 + $0x10] sm:$0x3]
        %s207 = scalar_lea.vmem %s195, 72
        %v208 = vld [vmem:[%s207] sm:$0xff]
        %v209 = vld [vmem:[%s207 + $0x8] sm:$0xff]
        %v210 = vld [vmem:[%s207 + $0x10] sm:$0x3]
        %s211 = sld [smem:[#allocation5]]
        %v212 = vstv %s211
        %s213 = sld [smem:[#allocation2]]
        %v214 = vstv %s213
        %v215 = vmul.f32 %v214, %v196
        %v216 = vmul.f32 %v214, %v197
        %v217 = vadd.f32 %v212, %v215
        %v218 = vadd.f32 %v212, %v216
        %s219 = sld [smem:[#allocation2 + $0x1]]
        %v220 = vstv %s219
        %v221 = vmul.f32 %v220, %v196
        %v222 = vmul.f32 %v220, %v197
        %225 = vrot.lane.b32.xlu0 %v221, 127
        %v226 = vpop.permute.xlu0 %225
        %227 = vrot.lane.b32.xlu0 %v222, 127
        %v228 = vpop.permute.xlu0 %227
        %v231 = vadd.f32 %v217, %v226
        %v232 = vadd.f32 %v218, %v228
        %s233 = sld [smem:[#allocation2 + $0x2]]
        %v234 = vstv %s233
        %v235 = vmul.f32 %v234, %v196
        %v236 = vmul.f32 %v234, %v197
        %239 = vrot.lane.b32.xlu0 %v235, 126
        %v240 = vpop.permute.xlu0 %239
        %241 = vrot.lane.b32.xlu0 %v236, 126
        %v242 = vpop.permute.xlu0 %241
        %v245 = vadd.f32 %v231, %v240
        %v246 = vadd.f32 %v232, %v242
        %s247 = sld [smem:[#allocation2 + $0x3]]
        %v248 = vstv %s247
        %v249 = vmul.f32 %v248, %v196
        %v250 = vmul.f32 %v248, %v197
        %v251 = vmul.f32 %v248, %v198
        %vm255 = vcmask 1046528
        %v256 = vrot.slane %v249, 1
        %v257 = vrot.slane %v250, 1
        %v258 = vsel %vm255, %v256, %v257
        %v259 = vrot.slane %v251, 1
        %v260 = vsel %vm255, %v257, %v259
        %v263 = vadd.f32 %v245, %v258
        %v264 = vadd.f32 %v246, %v260
        %s265 = sld [smem:[#allocation2 + $0x4]]
        %v266 = vstv %s265
        %v267 = vmul.f32 %v266, %v196
        %v268 = vmul.f32 %v266, %v197
        %v269 = vmul.f32 %v266, %v198
        %v273 = vrot.slane %v267, 1
        %v274 = vrot.slane %v268, 1
        %v275 = vsel %vm255, %v273, %v274
        %v276 = vrot.slane %v269, 1
        %v277 = vsel %vm255, %v274, %v276
        %278 = vrot.lane.b32.xlu0 %v275, 127
        %v279 = vpop.permute.xlu0 %278
        %280 = vrot.lane.b32.xlu0 %v277, 127
        %v281 = vpop.permute.xlu0 %280
        %v284 = vadd.f32 %v263, %v279
        %v285 = vadd.f32 %v264, %v281
        %s286 = sld [smem:[#allocation2 + $0x5]]
        %v287 = vstv %s286
        %v288 = vmul.f32 %v287, %v196
        %v289 = vmul.f32 %v287, %v197
        %v290 = vmul.f32 %v287, %v198
        %v294 = vrot.slane %v288, 1
        %v295 = vrot.slane %v289, 1
        %v296 = vsel %vm255, %v294, %v295
        %v297 = vrot.slane %v290, 1
        %v298 = vsel %vm255, %v295, %v297
        %299 = vrot.lane.b32.xlu0 %v296, 126
        %v300 = vpop.permute.xlu0 %299
        %301 = vrot.lane.b32.xlu0 %v298, 126
        %v302 = vpop.permute.xlu0 %301
        %v305 = vadd.f32 %v284, %v300
        %v306 = vadd.f32 %v285, %v302
        %s307 = sld [smem:[#allocation2 + $0x6]]
        %v308 = vstv %s307
        %v309 = vmul.f32 %v308, %v196
        %v310 = vmul.f32 %v308, %v197
        %v311 = vmul.f32 %v308, %v198
        %vm315 = vcmask 1045504
        %v316 = vrot.slane %v309, 2
        %v317 = vrot.slane %v310, 2
        %v318 = vsel %vm315, %v316, %v317
        %v319 = vrot.slane %v311, 2
        %v320 = vsel %vm315, %v317, %v319
        %v323 = vadd.f32 %v305, %v318
        %v324 = vadd.f32 %v306, %v320
        %s325 = sld [smem:[#allocation2 + $0x7]]
        %v326 = vstv %s325
        %v327 = vmul.f32 %v326, %v196
        %v328 = vmul.f32 %v326, %v197
        %v329 = vmul.f32 %v326, %v198
        %v333 = vrot.slane %v327, 2
        %v334 = vrot.slane %v328, 2
        %v335 = vsel %vm315, %v333, %v334
        %v336 = vrot.slane %v329, 2
        %v337 = vsel %vm315, %v334, %v336
        %338 = vrot.lane.b32.xlu0 %v335, 127
        %v339 = vpop.permute.xlu0 %338
        %340 = vrot.lane.b32.xlu0 %v337, 127
        %v341 = vpop.permute.xlu0 %340
        %v344 = vadd.f32 %v323, %v339
        %v345 = vadd.f32 %v324, %v341
        %s346 = sld [smem:[#allocation2 + $0x8]]
        %v347 = vstv %s346
        %v348 = vmul.f32 %v347, %v196
        %v349 = vmul.f32 %v347, %v197
        %v350 = vmul.f32 %v347, %v198
        %v354 = vrot.slane %v348, 2
        %v355 = vrot.slane %v349, 2
        %v356 = vsel %vm315, %v354, %v355
        %v357 = vrot.slane %v350, 2
        %v358 = vsel %vm315, %v355, %v357
        %359 = vrot.lane.b32.xlu0 %v356, 126
        %v360 = vpop.permute.xlu0 %359
        %361 = vrot.lane.b32.xlu0 %v358, 126
        %v362 = vpop.permute.xlu0 %361
        %v365 = vadd.f32 %v344, %v360
        %v366 = vadd.f32 %v345, %v362
        %s367 = sld [smem:[#allocation2 + $0x1b]]
        %v368 = vstv %s367
        %v369 = vmul.f32 %v368, %v200
        %v370 = vmul.f32 %v368, %v201
        %v371 = vadd.f32 %v365, %v369
        %v372 = vadd.f32 %v366, %v370
        %s373 = sld [smem:[#allocation2 + $0x1c]]
        %v374 = vstv %s373
        %v375 = vmul.f32 %v374, %v200
        %v376 = vmul.f32 %v374, %v201
        %379 = vrot.lane.b32.xlu0 %v375, 127
        %v380 = vpop.permute.xlu0 %379
        %381 = vrot.lane.b32.xlu0 %v376, 127
        %v382 = vpop.permute.xlu0 %381
        %v385 = vadd.f32 %v371, %v380
        %v386 = vadd.f32 %v372, %v382
        %s387 = sld [smem:[#allocation2 + $0x1d]]
        %v388 = vstv %s387
        %v389 = vmul.f32 %v388, %v200
        %v390 = vmul.f32 %v388, %v201
        %393 = vrot.lane.b32.xlu0 %v389, 126
        %v394 = vpop.permute.xlu0 %393
        %395 = vrot.lane.b32.xlu0 %v390, 126
        %v396 = vpop.permute.xlu0 %395
        %v399 = vadd.f32 %v385, %v394
        %v400 = vadd.f32 %v386, %v396
        %s401 = sld [smem:[#allocation2 + $0x1e]]
        %v402 = vstv %s401
        %v403 = vmul.f32 %v402, %v200
        %v404 = vmul.f32 %v402, %v201
        %v405 = vmul.f32 %v402, %v202
        %v409 = vrot.slane %v403, 1
        %v410 = vrot.slane %v404, 1
        %v411 = vsel %vm255, %v409, %v410
        %v412 = vrot.slane %v405, 1
        %v413 = vsel %vm255, %v410, %v412
        %v416 = vadd.f32 %v399, %v411
        %v417 = vadd.f32 %v400, %v413
        %s418 = sld [smem:[#allocation2 + $0x1f]]
        %v419 = vstv %s418
        %v420 = vmul.f32 %v419, %v200
        %v421 = vmul.f32 %v419, %v201
        %v422 = vmul.f32 %v419, %v202
        %v426 = vrot.slane %v420, 1
        %v427 = vrot.slane %v421, 1
        %v428 = vsel %vm255, %v426, %v427
        %v429 = vrot.slane %v422, 1
        %v430 = vsel %vm255, %v427, %v429
        %431 = vrot.lane.b32.xlu0 %v428, 127
        %v432 = vpop.permute.xlu0 %431
        %433 = vrot.lane.b32.xlu0 %v430, 127
        %v434 = vpop.permute.xlu0 %433
        %v437 = vadd.f32 %v416, %v432
        %v438 = vadd.f32 %v417, %v434
        %s439 = sld [smem:[#allocation2 + $0x20]]
        %v440 = vstv %s439
        %v441 = vmul.f32 %v440, %v200
        %v442 = vmul.f32 %v440, %v201
        %v443 = vmul.f32 %v440, %v202
        %v447 = vrot.slane %v441, 1
        %v448 = vrot.slane %v442, 1
        %v449 = vsel %vm255, %v447, %v448
        %v450 = vrot.slane %v443, 1
        %v451 = vsel %vm255, %v448, %v450
        %452 = vrot.lane.b32.xlu0 %v449, 126
        %v453 = vpop.permute.xlu0 %452
        %454 = vrot.lane.b32.xlu0 %v451, 126
        %v455 = vpop.permute.xlu0 %454
        %v458 = vadd.f32 %v437, %v453
        %v459 = vadd.f32 %v438, %v455
        %s460 = sld [smem:[#allocation2 + $0x21]]
        %v461 = vstv %s460
        %v462 = vmul.f32 %v461, %v200
        %v463 = vmul.f32 %v461, %v201
        %v464 = vmul.f32 %v461, %v202
        %v468 = vrot.slane %v462, 2
        %v469 = vrot.slane %v463, 2
        %v470 = vsel %vm315, %v468, %v469
        %v471 = vrot.slane %v464, 2
        %v472 = vsel %vm315, %v469, %v471
        %v475 = vadd.f32 %v458, %v470
        %v476 = vadd.f32 %v459, %v472
        %s477 = sld [smem:[#allocation2 + $0x22]]
        %v478 = vstv %s477
        %v479 = vmul.f32 %v478, %v200
        %v480 = vmul.f32 %v478, %v201
        %v481 = vmul.f32 %v478, %v202
        %v485 = vrot.slane %v479, 2
        %v486 = vrot.slane %v480, 2
        %v487 = vsel %vm315, %v485, %v486
        %v488 = vrot.slane %v481, 2
        %v489 = vsel %vm315, %v486, %v488
        %490 = vrot.lane.b32.xlu0 %v487, 127
        %v491 = vpop.permute.xlu0 %490
        %492 = vrot.lane.b32.xlu0 %v489, 127
        %v493 = vpop.permute.xlu0 %492
        %v496 = vadd.f32 %v475, %v491
        %v497 = vadd.f32 %v476, %v493
        %s498 = sld [smem:[#allocation2 + $0x23]]
        %v499 = vstv %s498
        %v500 = vmul.f32 %v499, %v200
        %v501 = vmul.f32 %v499, %v201
        %v502 = vmul.f32 %v499, %v202
        %v506 = vrot.slane %v500, 2
        %v507 = vrot.slane %v501, 2
        %v508 = vsel %vm315, %v506, %v507
        %v509 = vrot.slane %v502, 2
        %v510 = vsel %vm315, %v507, %v509
        %511 = vrot.lane.b32.xlu0 %v508, 126
        %v512 = vpop.permute.xlu0 %511
        %513 = vrot.lane.b32.xlu0 %v510, 126
        %v514 = vpop.permute.xlu0 %513
        %v517 = vadd.f32 %v496, %v512
        %v518 = vadd.f32 %v497, %v514
        %s519 = sld [smem:[#allocation2 + $0x36]]
        %v520 = vstv %s519
        %v521 = vmul.f32 %v520, %v204
        %v522 = vmul.f32 %v520, %v205
        %v523 = vadd.f32 %v517, %v521
        %v524 = vadd.f32 %v518, %v522
        %s525 = sld [smem:[#allocation2 + $0x37]]
        %v526 = vstv %s525
        %v527 = vmul.f32 %v526, %v204
        %v528 = vmul.f32 %v526, %v205
        %531 = vrot.lane.b32.xlu0 %v527, 127
        %v532 = vpop.permute.xlu0 %531
        %533 = vrot.lane.b32.xlu0 %v528, 127
        %v534 = vpop.permute.xlu0 %533
        %v537 = vadd.f32 %v523, %v532
        %v538 = vadd.f32 %v524, %v534
        %s539 = sld [smem:[#allocation2 + $0x38]]
        %v540 = vstv %s539
        %v541 = vmul.f32 %v540, %v204
        %v542 = vmul.f32 %v540, %v205
        %545 = vrot.lane.b32.xlu0 %v541, 126
        %v546 = vpop.permute.xlu0 %545
        %547 = vrot.lane.b32.xlu0 %v542, 126
        %v548 = vpop.permute.xlu0 %547
        %v551 = vadd.f32 %v537, %v546
        %v552 = vadd.f32 %v538, %v548
        %s553 = sld [smem:[#allocation2 + $0x39]]
        %v554 = vstv %s553
        %v555 = vmul.f32 %v554, %v204
        %v556 = vmul.f32 %v554, %v205
        %v557 = vmul.f32 %v554, %v206
        %v561 = vrot.slane %v555, 1
        %v562 = vrot.slane %v556, 1
        %v563 = vsel %vm255, %v561, %v562
        %v564 = vrot.slane %v557, 1
        %v565 = vsel %vm255, %v562, %v564
        %v568 = vadd.f32 %v551, %v563
        %v569 = vadd.f32 %v552, %v565
        %s570 = sld [smem:[#allocation2 + $0x3a]]
        %v571 = vstv %s570
        %v572 = vmul.f32 %v571, %v204
        %v573 = vmul.f32 %v571, %v205
        %v574 = vmul.f32 %v571, %v206
        %v578 = vrot.slane %v572, 1
        %v579 = vrot.slane %v573, 1
        %v580 = vsel %vm255, %v578, %v579
        %v581 = vrot.slane %v574, 1
        %v582 = vsel %vm255, %v579, %v581
        %583 = vrot.lane.b32.xlu0 %v580, 127
        %v584 = vpop.permute.xlu0 %583
        %585 = vrot.lane.b32.xlu0 %v582, 127
        %v586 = vpop.permute.xlu0 %585
        %v589 = vadd.f32 %v568, %v584
        %v590 = vadd.f32 %v569, %v586
        %s591 = sld [smem:[#allocation2 + $0x3b]]
        %v592 = vstv %s591
        %v593 = vmul.f32 %v592, %v204
        %v594 = vmul.f32 %v592, %v205
        %v595 = vmul.f32 %v592, %v206
        %v599 = vrot.slane %v593, 1
        %v600 = vrot.slane %v594, 1
        %v601 = vsel %vm255, %v599, %v600
        %v602 = vrot.slane %v595, 1
        %v603 = vsel %vm255, %v600, %v602
        %604 = vrot.lane.b32.xlu0 %v601, 126
        %v605 = vpop.permute.xlu0 %604
        %606 = vrot.lane.b32.xlu0 %v603, 126
        %v607 = vpop.permute.xlu0 %606
        %v610 = vadd.f32 %v589, %v605
        %v611 = vadd.f32 %v590, %v607
        %s612 = sld [smem:[#allocation2 + $0x3c]]
        %v613 = vstv %s612
        %v614 = vmul.f32 %v613, %v204
        %v615 = vmul.f32 %v613, %v205
        %v616 = vmul.f32 %v613, %v206
        %v620 = vrot.slane %v614, 2
        %v621 = vrot.slane %v615, 2
        %v622 = vsel %vm315, %v620, %v621
        %v623 = vrot.slane %v616, 2
        %v624 = vsel %vm315, %v621, %v623
        %v627 = vadd.f32 %v610, %v622
        %v628 = vadd.f32 %v611, %v624
        %s629 = sld [smem:[#allocation2 + $0x3d]]
        %v630 = vstv %s629
        %v631 = vmul.f32 %v630, %v204
        %v632 = vmul.f32 %v630, %v205
        %v633 = vmul.f32 %v630, %v206
        %v637 = vrot.slane %v631, 2
        %v638 = vrot.slane %v632, 2
        %v639 = vsel %vm315, %v637, %v638
        %v640 = vrot.slane %v633, 2
        %v641 = vsel %vm315, %v638, %v640
        %642 = vrot.lane.b32.xlu0 %v639, 127
        %v643 = vpop.permute.xlu0 %642
        %644 = vrot.lane.b32.xlu0 %v641, 127
        %v645 = vpop.permute.xlu0 %644
        %v648 = vadd.f32 %v627, %v643
        %v649 = vadd.f32 %v628, %v645
        %s650 = sld [smem:[#allocation2 + $0x3e]]
        %v651 = vstv %s650
        %v652 = vmul.f32 %v651, %v204
        %v653 = vmul.f32 %v651, %v205
        %v654 = vmul.f32 %v651, %v206
        %v658 = vrot.slane %v652, 2
        %v659 = vrot.slane %v653, 2
        %v660 = vsel %vm315, %v658, %v659
        %v661 = vrot.slane %v654, 2
        %v662 = vsel %vm315, %v659, %v661
        %663 = vrot.lane.b32.xlu0 %v660, 126
        %v664 = vpop.permute.xlu0 %663
        %665 = vrot.lane.b32.xlu0 %v662, 126
        %v666 = vpop.permute.xlu0 %665
        %v669 = vadd.f32 %v648, %v664
        %v670 = vadd.f32 %v649, %v666
        %s671 = sld [smem:[#allocation2 + $0x51]]
        %v672 = vstv %s671
        %v673 = vmul.f32 %v672, %v208
        %v674 = vmul.f32 %v672, %v209
        %v675 = vadd.f32 %v669, %v673
        %v676 = vadd.f32 %v670, %v674
        %s677 = sld [smem:[#allocation2 + $0x52]]
        %v678 = vstv %s677
        %v679 = vmul.f32 %v678, %v208
        %v680 = vmul.f32 %v678, %v209
        %683 = vrot.lane.b32.xlu0 %v679, 127
        %v684 = vpop.permute.xlu0 %683
        %685 = vrot.lane.b32.xlu0 %v680, 127
        %v686 = vpop.permute.xlu0 %685
        %v689 = vadd.f32 %v675, %v684
        %v690 = vadd.f32 %v676, %v686
        %s691 = sld [smem:[#allocation2 + $0x53]]
        %v692 = vstv %s691
        %v693 = vmul.f32 %v692, %v208
        %v694 = vmul.f32 %v692, %v209
        %697 = vrot.lane.b32.xlu0 %v693, 126
        %v698 = vpop.permute.xlu0 %697
        %699 = vrot.lane.b32.xlu0 %v694, 126
        %v700 = vpop.permute.xlu0 %699
        %v703 = vadd.f32 %v689, %v698
        %v704 = vadd.f32 %v690, %v700
        %s705 = sld [smem:[#allocation2 + $0x54]]
        %v706 = vstv %s705
        %v707 = vmul.f32 %v706, %v208
        %v708 = vmul.f32 %v706, %v209
        %v709 = vmul.f32 %v706, %v210
        %v713 = vrot.slane %v707, 1
        %v714 = vrot.slane %v708, 1
        %v715 = vsel %vm255, %v713, %v714
        %v716 = vrot.slane %v709, 1
        %v717 = vsel %vm255, %v714, %v716
        %v720 = vadd.f32 %v703, %v715
        %v721 = vadd.f32 %v704, %v717
        %s722 = sld [smem:[#allocation2 + $0x55]]
        %v723 = vstv %s722
        %v724 = vmul.f32 %v723, %v208
        %v725 = vmul.f32 %v723, %v209
        %v726 = vmul.f32 %v723, %v210
        %v730 = vrot.slane %v724, 1
        %v731 = vrot.slane %v725, 1
        %v732 = vsel %vm255, %v730, %v731
        %v733 = vrot.slane %v726, 1
        %v734 = vsel %vm255, %v731, %v733
        %735 = vrot.lane.b32.xlu0 %v732, 127
        %v736 = vpop.permute.xlu0 %735
        %737 = vrot.lane.b32.xlu0 %v734, 127
        %v738 = vpop.permute.xlu0 %737
        %v741 = vadd.f32 %v720, %v736
        %v742 = vadd.f32 %v721, %v738
        %s743 = sld [smem:[#allocation2 + $0x56]]
        %v744 = vstv %s743
        %v745 = vmul.f32 %v744, %v208
        %v746 = vmul.f32 %v744, %v209
        %v747 = vmul.f32 %v744, %v210
        %v751 = vrot.slane %v745, 1
        %v752 = vrot.slane %v746, 1
        %v753 = vsel %vm255, %v751, %v752
        %v754 = vrot.slane %v747, 1
        %v755 = vsel %vm255, %v752, %v754
        %756 = vrot.lane.b32.xlu0 %v753, 126
        %v757 = vpop.permute.xlu0 %756
        %758 = vrot.lane.b32.xlu0 %v755, 126
        %v759 = vpop.permute.xlu0 %758
        %v762 = vadd.f32 %v741, %v757
        %v763 = vadd.f32 %v742, %v759
        %s764 = sld [smem:[#allocation2 + $0x57]]
        %v765 = vstv %s764
        %v766 = vmul.f32 %v765, %v208
        %v767 = vmul.f32 %v765, %v209
        %v768 = vmul.f32 %v765, %v210
        %v772 = vrot.slane %v766, 2
        %v773 = vrot.slane %v767, 2
        %v774 = vsel %vm315, %v772, %v773
        %v775 = vrot.slane %v768, 2
        %v776 = vsel %vm315, %v773, %v775
        %v779 = vadd.f32 %v762, %v774
        %v780 = vadd.f32 %v763, %v776
        %s781 = sld [smem:[#allocation2 + $0x58]]
        %v782 = vstv %s781
        %v783 = vmul.f32 %v782, %v208
        %v784 = vmul.f32 %v782, %v209
        %v785 = vmul.f32 %v782, %v210
        %v789 = vrot.slane %v783, 2
        %v790 = vrot.slane %v784, 2
        %v791 = vsel %vm315, %v789, %v790
        %v792 = vrot.slane %v785, 2
        %v793 = vsel %vm315, %v790, %v792
        %794 = vrot.lane.b32.xlu0 %v791, 127
        %v795 = vpop.permute.xlu0 %794
        %796 = vrot.lane.b32.xlu0 %v793, 127
        %v797 = vpop.permute.xlu0 %796
        %v800 = vadd.f32 %v779, %v795
        %v801 = vadd.f32 %v780, %v797
        %s802 = sld [smem:[#allocation2 + $0x59]]
        %v803 = vstv %s802
        %v804 = vmul.f32 %v803, %v208
        %v805 = vmul.f32 %v803, %v209
        %v806 = vmul.f32 %v803, %v210
        %v810 = vrot.slane %v804, 2
        %v811 = vrot.slane %v805, 2
        %v812 = vsel %vm315, %v810, %v811
        %v813 = vrot.slane %v806, 2
        %v814 = vsel %vm315, %v811, %v813
        %815 = vrot.lane.b32.xlu0 %v812, 126
        %v816 = vpop.permute.xlu0 %815
        %817 = vrot.lane.b32.xlu0 %v814, 126
        %v818 = vpop.permute.xlu0 %817
        %v821 = vadd.f32 %v800, %v816
        %v822 = vadd.f32 %v801, %v818
        %v823 = vtanh.pop %v821
        %v824 = vtanh.pop %v822
        %vm825 = vcmask 130048
        %826 = vst.msk [vmem:[%s190] sm:$0xff] %vm825, %v823
        %827 = vst.msk [vmem:[%s190 + $0x8] sm:$0xff] %vm825, %v824
        %s828 = sld [smem:[#allocation5 + $0x1]]
        %v829 = vstv %s828
        %s830 = sld [smem:[#allocation2 + $0x9]]
        %v831 = vstv %s830
        %v832 = vmul.f32 %v831, %v196
        %v833 = vmul.f32 %v831, %v197
        %v834 = vadd.f32 %v829, %v832
        %v835 = vadd.f32 %v829, %v833
        %s836 = sld [smem:[#allocation2 + $0xa]]
        %v837 = vstv %s836
        %v838 = vmul.f32 %v837, %v196
        %v839 = vmul.f32 %v837, %v197
        %842 = vrot.lane.b32.xlu0 %v838, 127
        %v843 = vpop.permute.xlu0 %842
        %844 = vrot.lane.b32.xlu0 %v839, 127
        %v845 = vpop.permute.xlu0 %844
        %v848 = vadd.f32 %v834, %v843
        %v849 = vadd.f32 %v835, %v845
        %s850 = sld [smem:[#allocation2 + $0xb]]
        %v851 = vstv %s850
        %v852 = vmul.f32 %v851, %v196
        %v853 = vmul.f32 %v851, %v197
        %856 = vrot.lane.b32.xlu0 %v852, 126
        %v857 = vpop.permute.xlu0 %856
        %858 = vrot.lane.b32.xlu0 %v853, 126
        %v859 = vpop.permute.xlu0 %858
        %v862 = vadd.f32 %v848, %v857
        %v863 = vadd.f32 %v849, %v859
        %s864 = sld [smem:[#allocation2 + $0xc]]
        %v865 = vstv %s864
        %v866 = vmul.f32 %v865, %v196
        %v867 = vmul.f32 %v865, %v197
        %v868 = vmul.f32 %v865, %v198
        %v872 = vrot.slane %v866, 1
        %v873 = vrot.slane %v867, 1
        %v874 = vsel %vm255, %v872, %v873
        %v875 = vrot.slane %v868, 1
        %v876 = vsel %vm255, %v873, %v875
        %v879 = vadd.f32 %v862, %v874
        %v880 = vadd.f32 %v863, %v876
        %s881 = sld [smem:[#allocation2 + $0xd]]
        %v882 = vstv %s881
        %v883 = vmul.f32 %v882, %v196
        %v884 = vmul.f32 %v882, %v197
        %v885 = vmul.f32 %v882, %v198
        %v889 = vrot.slane %v883, 1
        %v890 = vrot.slane %v884, 1
        %v891 = vsel %vm255, %v889, %v890
        %v892 = vrot.slane %v885, 1
        %v893 = vsel %vm255, %v890, %v892
        %894 = vrot.lane.b32.xlu0 %v891, 127
        %v895 = vpop.permute.xlu0 %894
        %896 = vrot.lane.b32.xlu0 %v893, 127
        %v897 = vpop.permute.xlu0 %896
        %v900 = vadd.f32 %v879, %v895
        %v901 = vadd.f32 %v880, %v897
        %s902 = sld [smem:[#allocation2 + $0xe]]
        %v903 = vstv %s902
        %v904 = vmul.f32 %v903, %v196
        %v905 = vmul.f32 %v903, %v197
        %v906 = vmul.f32 %v903, %v198
        %v910 = vrot.slane %v904, 1
        %v911 = vrot.slane %v905, 1
        %v912 = vsel %vm255, %v910, %v911
        %v913 = vrot.slane %v906, 1
        %v914 = vsel %vm255, %v911, %v913
        %915 = vrot.lane.b32.xlu0 %v912, 126
        %v916 = vpop.permute.xlu0 %915
        %917 = vrot.lane.b32.xlu0 %v914, 126
        %v918 = vpop.permute.xlu0 %917
        %v921 = vadd.f32 %v900, %v916
        %v922 = vadd.f32 %v901, %v918
        %s923 = sld [smem:[#allocation2 + $0xf]]
        %v924 = vstv %s923
        %v925 = vmul.f32 %v924, %v196
        %v926 = vmul.f32 %v924, %v197
        %v927 = vmul.f32 %v924, %v198
        %v931 = vrot.slane %v925, 2
        %v932 = vrot.slane %v926, 2
        %v933 = vsel %vm315, %v931, %v932
        %v934 = vrot.slane %v927, 2
        %v935 = vsel %vm315, %v932, %v934
        %v938 = vadd.f32 %v921, %v933
        %v939 = vadd.f32 %v922, %v935
        %s940 = sld [smem:[#allocation2 + $0x10]]
        %v941 = vstv %s940
        %v942 = vmul.f32 %v941, %v196
        %v943 = vmul.f32 %v941, %v197
        %v944 = vmul.f32 %v941, %v198
        %v948 = vrot.slane %v942, 2
        %v949 = vrot.slane %v943, 2
        %v950 = vsel %vm315, %v948, %v949
        %v951 = vrot.slane %v944, 2
        %v952 = vsel %vm315, %v949, %v951
        %953 = vrot.lane.b32.xlu0 %v950, 127
        %v954 = vpop.permute.xlu0 %953
        %955 = vrot.lane.b32.xlu0 %v952, 127
        %v956 = vpop.permute.xlu0 %955
        %v959 = vadd.f32 %v938, %v954
        %v960 = vadd.f32 %v939, %v956
        %s961 = sld [smem:[#allocation2 + $0x11]]
        %v962 = vstv %s961
        %v963 = vmul.f32 %v962, %v196
        %v964 = vmul.f32 %v962, %v197
        %v965 = vmul.f32 %v962, %v198
        %v969 = vrot.slane %v963, 2
        %v970 = vrot.slane %v964, 2
        %v971 = vsel %vm315, %v969, %v970
        %v972 = vrot.slane %v965, 2
        %v973 = vsel %vm315, %v970, %v972
        %974 = vrot.lane.b32.xlu0 %v971, 126
        %v975 = vpop.permute.xlu0 %974
        %976 = vrot.lane.b32.xlu0 %v973, 126
        %v977 = vpop.permute.xlu0 %976
        %v980 = vadd.f32 %v959, %v975
        %v981 = vadd.f32 %v960, %v977
        %s982 = sld [smem:[#allocation2 + $0x24]]
        %v983 = vstv %s982
        %v984 = vmul.f32 %v983, %v200
        %v985 = vmul.f32 %v983, %v201
        %v986 = vadd.f32 %v980, %v984
        %v987 = vadd.f32 %v981, %v985
        %s988 = sld [smem:[#allocation2 + $0x25]]
        %v989 = vstv %s988
        %v990 = vmul.f32 %v989, %v200
        %v991 = vmul.f32 %v989, %v201
        %994 = vrot.lane.b32.xlu0 %v990, 127
        %v995 = vpop.permute.xlu0 %994
        %996 = vrot.lane.b32.xlu0 %v991, 127
        %v997 = vpop.permute.xlu0 %996
        %v1000 = vadd.f32 %v986, %v995
        %v1001 = vadd.f32 %v987, %v997
        %s1002 = sld [smem:[#allocation2 + $0x26]]
        %v1003 = vstv %s1002
        %v1004 = vmul.f32 %v1003, %v200
        %v1005 = vmul.f32 %v1003, %v201
        %1008 = vrot.lane.b32.xlu0 %v1004, 126
        %v1009 = vpop.permute.xlu0 %1008
        %1010 = vrot.lane.b32.xlu0 %v1005, 126
        %v1011 = vpop.permute.xlu0 %1010
        %v1014 = vadd.f32 %v1000, %v1009
        %v1015 = vadd.f32 %v1001, %v1011
        %s1016 = sld [smem:[#allocation2 + $0x27]]
        %v1017 = vstv %s1016
        %v1018 = vmul.f32 %v1017, %v200
        %v1019 = vmul.f32 %v1017, %v201
        %v1020 = vmul.f32 %v1017, %v202
        %v1024 = vrot.slane %v1018, 1
        %v1025 = vrot.slane %v1019, 1
        %v1026 = vsel %vm255, %v1024, %v1025
        %v1027 = vrot.slane %v1020, 1
        %v1028 = vsel %vm255, %v1025, %v1027
        %v1031 = vadd.f32 %v1014, %v1026
        %v1032 = vadd.f32 %v1015, %v1028
        %s1033 = sld [smem:[#allocation2 + $0x28]]
        %v1034 = vstv %s1033
        %v1035 = vmul.f32 %v1034, %v200
        %v1036 = vmul.f32 %v1034, %v201
        %v1037 = vmul.f32 %v1034, %v202
        %v1041 = vrot.slane %v1035, 1
        %v1042 = vrot.slane %v1036, 1
        %v1043 = vsel %vm255, %v1041, %v1042
        %v1044 = vrot.slane %v1037, 1
        %v1045 = vsel %vm255, %v1042, %v1044
        %1046 = vrot.lane.b32.xlu0 %v1043, 127
        %v1047 = vpop.permute.xlu0 %1046
        %1048 = vrot.lane.b32.xlu0 %v1045, 127
        %v1049 = vpop.permute.xlu0 %1048
        %v1052 = vadd.f32 %v1031, %v1047
        %v1053 = vadd.f32 %v1032, %v1049
        %s1054 = sld [smem:[#allocation2 + $0x29]]
        %v1055 = vstv %s1054
        %v1056 = vmul.f32 %v1055, %v200
        %v1057 = vmul.f32 %v1055, %v201
        %v1058 = vmul.f32 %v1055, %v202
        %v1062 = vrot.slane %v1056, 1
        %v1063 = vrot.slane %v1057, 1
        %v1064 = vsel %vm255, %v1062, %v1063
        %v1065 = vrot.slane %v1058, 1
        %v1066 = vsel %vm255, %v1063, %v1065
        %1067 = vrot.lane.b32.xlu0 %v1064, 126
        %v1068 = vpop.permute.xlu0 %1067
        %1069 = vrot.lane.b32.xlu0 %v1066, 126
        %v1070 = vpop.permute.xlu0 %1069
        %v1073 = vadd.f32 %v1052, %v1068
        %v1074 = vadd.f32 %v1053, %v1070
        %s1075 = sld [smem:[#allocation2 + $0x2a]]
        %v1076 = vstv %s1075
        %v1077 = vmul.f32 %v1076, %v200
        %v1078 = vmul.f32 %v1076, %v201
        %v1079 = vmul.f32 %v1076, %v202
        %v1083 = vrot.slane %v1077, 2
        %v1084 = vrot.slane %v1078, 2
        %v1085 = vsel %vm315, %v1083, %v1084
        %v1086 = vrot.slane %v1079, 2
        %v1087 = vsel %vm315, %v1084, %v1086
        %v1090 = vadd.f32 %v1073, %v1085
        %v1091 = vadd.f32 %v1074, %v1087
        %s1092 = sld [smem:[#allocation2 + $0x2b]]
        %v1093 = vstv %s1092
        %v1094 = vmul.f32 %v1093, %v200
        %v1095 = vmul.f32 %v1093, %v201
        %v1096 = vmul.f32 %v1093, %v202
        %v1100 = vrot.slane %v1094, 2
        %v1101 = vrot.slane %v1095, 2
        %v1102 = vsel %vm315, %v1100, %v1101
        %v1103 = vrot.slane %v1096, 2
        %v1104 = vsel %vm315, %v1101, %v1103
        %1105 = vrot.lane.b32.xlu0 %v1102, 127
        %v1106 = vpop.permute.xlu0 %1105
        %1107 = vrot.lane.b32.xlu0 %v1104, 127
        %v1108 = vpop.permute.xlu0 %1107
        %v1111 = vadd.f32 %v1090, %v1106
        %v1112 = vadd.f32 %v1091, %v1108
        %s1113 = sld [smem:[#allocation2 + $0x2c]]
        %v1114 = vstv %s1113
        %v1115 = vmul.f32 %v1114, %v200
        %v1116 = vmul.f32 %v1114, %v201
        %v1117 = vmul.f32 %v1114, %v202
        %v1121 = vrot.slane %v1115, 2
        %v1122 = vrot.slane %v1116, 2
        %v1123 = vsel %vm315, %v1121, %v1122
        %v1124 = vrot.slane %v1117, 2
        %v1125 = vsel %vm315, %v1122, %v1124
        %1126 = vrot.lane.b32.xlu0 %v1123, 126
        %v1127 = vpop.permute.xlu0 %1126
        %1128 = vrot.lane.b32.xlu0 %v1125, 126
        %v1129 = vpop.permute.xlu0 %1128
        %v1132 = vadd.f32 %v1111, %v1127
        %v1133 = vadd.f32 %v1112, %v1129
        %s1134 = sld [smem:[#allocation2 + $0x3f]]
        %v1135 = vstv %s1134
        %v1136 = vmul.f32 %v1135, %v204
        %v1137 = vmul.f32 %v1135, %v205
        %v1138 = vadd.f32 %v1132, %v1136
        %v1139 = vadd.f32 %v1133, %v1137
        %s1140 = sld [smem:[#allocation2 + $0x40]]
        %v1141 = vstv %s1140
        %v1142 = vmul.f32 %v1141, %v204
        %v1143 = vmul.f32 %v1141, %v205
        %1146 = vrot.lane.b32.xlu0 %v1142, 127
        %v1147 = vpop.permute.xlu0 %1146
        %1148 = vrot.lane.b32.xlu0 %v1143, 127
        %v1149 = vpop.permute.xlu0 %1148
        %v1152 = vadd.f32 %v1138, %v1147
        %v1153 = vadd.f32 %v1139, %v1149
        %s1154 = sld [smem:[#allocation2 + $0x41]]
        %v1155 = vstv %s1154
        %v1156 = vmul.f32 %v1155, %v204
        %v1157 = vmul.f32 %v1155, %v205
        %1160 = vrot.lane.b32.xlu0 %v1156, 126
        %v1161 = vpop.permute.xlu0 %1160
        %1162 = vrot.lane.b32.xlu0 %v1157, 126
        %v1163 = vpop.permute.xlu0 %1162
        %v1166 = vadd.f32 %v1152, %v1161
        %v1167 = vadd.f32 %v1153, %v1163
        %s1168 = sld [smem:[#allocation2 + $0x42]]
        %v1169 = vstv %s1168
        %v1170 = vmul.f32 %v1169, %v204
        %v1171 = vmul.f32 %v1169, %v205
        %v1172 = vmul.f32 %v1169, %v206
        %v1176 = vrot.slane %v1170, 1
        %v1177 = vrot.slane %v1171, 1
        %v1178 = vsel %vm255, %v1176, %v1177
        %v1179 = vrot.slane %v1172, 1
        %v1180 = vsel %vm255, %v1177, %v1179
        %v1183 = vadd.f32 %v1166, %v1178
        %v1184 = vadd.f32 %v1167, %v1180
        %s1185 = sld [smem:[#allocation2 + $0x43]]
        %v1186 = vstv %s1185
        %v1187 = vmul.f32 %v1186, %v204
        %v1188 = vmul.f32 %v1186, %v205
        %v1189 = vmul.f32 %v1186, %v206
        %v1193 = vrot.slane %v1187, 1
        %v1194 = vrot.slane %v1188, 1
        %v1195 = vsel %vm255, %v1193, %v1194
        %v1196 = vrot.slane %v1189, 1
        %v1197 = vsel %vm255, %v1194, %v1196
        %1198 = vrot.lane.b32.xlu0 %v1195, 127
        %v1199 = vpop.permute.xlu0 %1198
        %1200 = vrot.lane.b32.xlu0 %v1197, 127
        %v1201 = vpop.permute.xlu0 %1200
        %v1204 = vadd.f32 %v1183, %v1199
        %v1205 = vadd.f32 %v1184, %v1201
        %s1206 = sld [smem:[#allocation2 + $0x44]]
        %v1207 = vstv %s1206
        %v1208 = vmul.f32 %v1207, %v204
        %v1209 = vmul.f32 %v1207, %v205
        %v1210 = vmul.f32 %v1207, %v206
        %v1214 = vrot.slane %v1208, 1
        %v1215 = vrot.slane %v1209, 1
        %v1216 = vsel %vm255, %v1214, %v1215
        %v1217 = vrot.slane %v1210, 1
        %v1218 = vsel %vm255, %v1215, %v1217
        %1219 = vrot.lane.b32.xlu0 %v1216, 126
        %v1220 = vpop.permute.xlu0 %1219
        %1221 = vrot.lane.b32.xlu0 %v1218, 126
        %v1222 = vpop.permute.xlu0 %1221
        %v1225 = vadd.f32 %v1204, %v1220
        %v1226 = vadd.f32 %v1205, %v1222
        %s1227 = sld [smem:[#allocation2 + $0x45]]
        %v1228 = vstv %s1227
        %v1229 = vmul.f32 %v1228, %v204
        %v1230 = vmul.f32 %v1228, %v205
        %v1231 = vmul.f32 %v1228, %v206
        %v1235 = vrot.slane %v1229, 2
        %v1236 = vrot.slane %v1230, 2
        %v1237 = vsel %vm315, %v1235, %v1236
        %v1238 = vrot.slane %v1231, 2
        %v1239 = vsel %vm315, %v1236, %v1238
        %v1242 = vadd.f32 %v1225, %v1237
        %v1243 = vadd.f32 %v1226, %v1239
        %s1244 = sld [smem:[#allocation2 + $0x46]]
        %v1245 = vstv %s1244
        %v1246 = vmul.f32 %v1245, %v204
        %v1247 = vmul.f32 %v1245, %v205
        %v1248 = vmul.f32 %v1245, %v206
        %v1252 = vrot.slane %v1246, 2
        %v1253 = vrot.slane %v1247, 2
        %v1254 = vsel %vm315, %v1252, %v1253
        %v1255 = vrot.slane %v1248, 2
        %v1256 = vsel %vm315, %v1253, %v1255
        %1257 = vrot.lane.b32.xlu0 %v1254, 127
        %v1258 = vpop.permute.xlu0 %1257
        %1259 = vrot.lane.b32.xlu0 %v1256, 127
        %v1260 = vpop.permute.xlu0 %1259
        %v1263 = vadd.f32 %v1242, %v1258
        %v1264 = vadd.f32 %v1243, %v1260
        %s1265 = sld [smem:[#allocation2 + $0x47]]
        %v1266 = vstv %s1265
        %v1267 = vmul.f32 %v1266, %v204
        %v1268 = vmul.f32 %v1266, %v205
        %v1269 = vmul.f32 %v1266, %v206
        %v1273 = vrot.slane %v1267, 2
        %v1274 = vrot.slane %v1268, 2
        %v1275 = vsel %vm315, %v1273, %v1274
        %v1276 = vrot.slane %v1269, 2
        %v1277 = vsel %vm315, %v1274, %v1276
        %1278 = vrot.lane.b32.xlu0 %v1275, 126
        %v1279 = vpop.permute.xlu0 %1278
        %1280 = vrot.lane.b32.xlu0 %v1277, 126
        %v1281 = vpop.permute.xlu0 %1280
        %v1284 = vadd.f32 %v1263, %v1279
        %v1285 = vadd.f32 %v1264, %v1281
        %s1286 = sld [smem:[#allocation2 + $0x5a]]
        %v1287 = vstv %s1286
        %v1288 = vmul.f32 %v1287, %v208
        %v1289 = vmul.f32 %v1287, %v209
        %v1290 = vadd.f32 %v1284, %v1288
        %v1291 = vadd.f32 %v1285, %v1289
        %s1292 = sld [smem:[#allocation2 + $0x5b]]
        %v1293 = vstv %s1292
        %v1294 = vmul.f32 %v1293, %v208
        %v1295 = vmul.f32 %v1293, %v209
        %1298 = vrot.lane.b32.xlu0 %v1294, 127
        %v1299 = vpop.permute.xlu0 %1298
        %1300 = vrot.lane.b32.xlu0 %v1295, 127
        %v1301 = vpop.permute.xlu0 %1300
        %v1304 = vadd.f32 %v1290, %v1299
        %v1305 = vadd.f32 %v1291, %v1301
        %s1306 = sld [smem:[#allocation2 + $0x5c]]
        %v1307 = vstv %s1306
        %v1308 = vmul.f32 %v1307, %v208
        %v1309 = vmul.f32 %v1307, %v209
        %1312 = vrot.lane.b32.xlu0 %v1308, 126
        %v1313 = vpop.permute.xlu0 %1312
        %1314 = vrot.lane.b32.xlu0 %v1309, 126
        %v1315 = vpop.permute.xlu0 %1314
        %v1318 = vadd.f32 %v1304, %v1313
        %v1319 = vadd.f32 %v1305, %v1315
        %s1320 = sld [smem:[#allocation2 + $0x5d]]
        %v1321 = vstv %s1320
        %v1322 = vmul.f32 %v1321, %v208
        %v1323 = vmul.f32 %v1321, %v209
        %v1324 = vmul.f32 %v1321, %v210
        %v1328 = vrot.slane %v1322, 1
        %v1329 = vrot.slane %v1323, 1
        %v1330 = vsel %vm255, %v1328, %v1329
        %v1331 = vrot.slane %v1324, 1
        %v1332 = vsel %vm255, %v1329, %v1331
        %v1335 = vadd.f32 %v1318, %v1330
        %v1336 = vadd.f32 %v1319, %v1332
        %s1337 = sld [smem:[#allocation2 + $0x5e]]
        %v1338 = vstv %s1337
        %v1339 = vmul.f32 %v1338, %v208
        %v1340 = vmul.f32 %v1338, %v209
        %v1341 = vmul.f32 %v1338, %v210
        %v1345 = vrot.slane %v1339, 1
        %v1346 = vrot.slane %v1340, 1
        %v1347 = vsel %vm255, %v1345, %v1346
        %v1348 = vrot.slane %v1341, 1
        %v1349 = vsel %vm255, %v1346, %v1348
        %1350 = vrot.lane.b32.xlu0 %v1347, 127
        %v1351 = vpop.permute.xlu0 %1350
        %1352 = vrot.lane.b32.xlu0 %v1349, 127
        %v1353 = vpop.permute.xlu0 %1352
        %v1356 = vadd.f32 %v1335, %v1351
        %v1357 = vadd.f32 %v1336, %v1353
        %s1358 = sld [smem:[#allocation2 + $0x5f]]
        %v1359 = vstv %s1358
        %v1360 = vmul.f32 %v1359, %v208
        %v1361 = vmul.f32 %v1359, %v209
        %v1362 = vmul.f32 %v1359, %v210
        %v1366 = vrot.slane %v1360, 1
        %v1367 = vrot.slane %v1361, 1
        %v1368 = vsel %vm255, %v1366, %v1367
        %v1369 = vrot.slane %v1362, 1
        %v1370 = vsel %vm255, %v1367, %v1369
        %1371 = vrot.lane.b32.xlu0 %v1368, 126
        %v1372 = vpop.permute.xlu0 %1371
        %1373 = vrot.lane.b32.xlu0 %v1370, 126
        %v1374 = vpop.permute.xlu0 %1373
        %v1377 = vadd.f32 %v1356, %v1372
        %v1378 = vadd.f32 %v1357, %v1374
        %s1379 = sld [smem:[#allocation2 + $0x60]]
        %v1380 = vstv %s1379
        %v1381 = vmul.f32 %v1380, %v208
        %v1382 = vmul.f32 %v1380, %v209
        %v1383 = vmul.f32 %v1380, %v210
        %v1387 = vrot.slane %v1381, 2
        %v1388 = vrot.slane %v1382, 2
        %v1389 = vsel %vm315, %v1387, %v1388
        %v1390 = vrot.slane %v1383, 2
        %v1391 = vsel %vm315, %v1388, %v1390
        %v1394 = vadd.f32 %v1377, %v1389
        %v1395 = vadd.f32 %v1378, %v1391
        %s1396 = sld [smem:[#allocation2 + $0x61]]
        %v1397 = vstv %s1396
        %v1398 = vmul.f32 %v1397, %v208
        %v1399 = vmul.f32 %v1397, %v209
        %v1400 = vmul.f32 %v1397, %v210
        %v1404 = vrot.slane %v1398, 2
        %v1405 = vrot.slane %v1399, 2
        %v1406 = vsel %vm315, %v1404, %v1405
        %v1407 = vrot.slane %v1400, 2
        %v1408 = vsel %vm315, %v1405, %v1407
        %1409 = vrot.lane.b32.xlu0 %v1406, 127
        %v1410 = vpop.permute.xlu0 %1409
        %1411 = vrot.lane.b32.xlu0 %v1408, 127
        %v1412 = vpop.permute.xlu0 %1411
        %v1415 = vadd.f32 %v1394, %v1410
        %v1416 = vadd.f32 %v1395, %v1412
        %s1417 = sld [smem:[#allocation2 + $0x62]]
        %v1418 = vstv %s1417
        %v1419 = vmul.f32 %v1418, %v208
        %v1420 = vmul.f32 %v1418, %v209
        %v1421 = vmul.f32 %v1418, %v210
        %v1425 = vrot.slane %v1419, 2
        %v1426 = vrot.slane %v1420, 2
        %v1427 = vsel %vm315, %v1425, %v1426
        %v1428 = vrot.slane %v1421, 2
        %v1429 = vsel %vm315, %v1426, %v1428
        %1430 = vrot.lane.b32.xlu0 %v1427, 126
        %v1431 = vpop.permute.xlu0 %1430
        %1432 = vrot.lane.b32.xlu0 %v1429, 126
        %v1433 = vpop.permute.xlu0 %1432
        %v1436 = vadd.f32 %v1415, %v1431
        %v1437 = vadd.f32 %v1416, %v1433
        %v1438 = vtanh.pop %v1436
        %v1439 = vtanh.pop %v1437
        %s1440 = scalar_lea.vmem %s190, 16 [#allocation7]
        %1441 = vst.msk [vmem:[%s1440] sm:$0xff] %vm825, %v1438
        %1442 = vst.msk [vmem:[%s1440 + $0x8] sm:$0xff] %vm825, %v1439
        %s1443 = sld [smem:[#allocation5 + $0x2]]
        %v1444 = vstv %s1443
        %s1445 = sld [smem:[#allocation2 + $0x12]]
        %v1446 = vstv %s1445
        %v1447 = vmul.f32 %v1446, %v196
        %v1448 = vmul.f32 %v1446, %v197
        %v1449 = vadd.f32 %v1444, %v1447
        %v1450 = vadd.f32 %v1444, %v1448
        %s1451 = sld [smem:[#allocation2 + $0x13]]
        %v1452 = vstv %s1451
        %v1453 = vmul.f32 %v1452, %v196
        %v1454 = vmul.f32 %v1452, %v197
        %1457 = vrot.lane.b32.xlu0 %v1453, 127
        %v1458 = vpop.permute.xlu0 %1457
        %1459 = vrot.lane.b32.xlu0 %v1454, 127
        %v1460 = vpop.permute.xlu0 %1459
        %v1463 = vadd.f32 %v1449, %v1458
        %v1464 = vadd.f32 %v1450, %v1460
        %s1465 = sld [smem:[#allocation2 + $0x14]]
        %v1466 = vstv %s1465
        %v1467 = vmul.f32 %v1466, %v196
        %v1468 = vmul.f32 %v1466, %v197
        %1471 = vrot.lane.b32.xlu0 %v1467, 126
        %v1472 = vpop.permute.xlu0 %1471
        %1473 = vrot.lane.b32.xlu0 %v1468, 126
        %v1474 = vpop.permute.xlu0 %1473
        %v1477 = vadd.f32 %v1463, %v1472
        %v1478 = vadd.f32 %v1464, %v1474
        %s1479 = sld [smem:[#allocation2 + $0x15]]
        %v1480 = vstv %s1479
        %v1481 = vmul.f32 %v1480, %v196
        %v1482 = vmul.f32 %v1480, %v197
        %v1483 = vmul.f32 %v1480, %v198
        %v1487 = vrot.slane %v1481, 1
        %v1488 = vrot.slane %v1482, 1
        %v1489 = vsel %vm255, %v1487, %v1488
        %v1490 = vrot.slane %v1483, 1
        %v1491 = vsel %vm255, %v1488, %v1490
        %v1494 = vadd.f32 %v1477, %v1489
        %v1495 = vadd.f32 %v1478, %v1491
        %s1496 = sld [smem:[#allocation2 + $0x16]]
        %v1497 = vstv %s1496
        %v1498 = vmul.f32 %v1497, %v196
        %v1499 = vmul.f32 %v1497, %v197
        %v1500 = vmul.f32 %v1497, %v198
        %v1504 = vrot.slane %v1498, 1
        %v1505 = vrot.slane %v1499, 1
        %v1506 = vsel %vm255, %v1504, %v1505
        %v1507 = vrot.slane %v1500, 1
        %v1508 = vsel %vm255, %v1505, %v1507
        %1509 = vrot.lane.b32.xlu0 %v1506, 127
        %v1510 = vpop.permute.xlu0 %1509
        %1511 = vrot.lane.b32.xlu0 %v1508, 127
        %v1512 = vpop.permute.xlu0 %1511
        %v1515 = vadd.f32 %v1494, %v1510
        %v1516 = vadd.f32 %v1495, %v1512
        %s1517 = sld [smem:[#allocation2 + $0x17]]
        %v1518 = vstv %s1517
        %v1519 = vmul.f32 %v1518, %v196
        %v1520 = vmul.f32 %v1518, %v197
        %v1521 = vmul.f32 %v1518, %v198
        %v1525 = vrot.slane %v1519, 1
        %v1526 = vrot.slane %v1520, 1
        %v1527 = vsel %vm255, %v1525, %v1526
        %v1528 = vrot.slane %v1521, 1
        %v1529 = vsel %vm255, %v1526, %v1528
        %1530 = vrot.lane.b32.xlu0 %v1527, 126
        %v1531 = vpop.permute.xlu0 %1530
        %1532 = vrot.lane.b32.xlu0 %v1529, 126
        %v1533 = vpop.permute.xlu0 %1532
        %v1536 = vadd.f32 %v1515, %v1531
        %v1537 = vadd.f32 %v1516, %v1533
        %s1538 = sld [smem:[#allocation2 + $0x18]]
        %v1539 = vstv %s1538
        %v1540 = vmul.f32 %v1539, %v196
        %v1541 = vmul.f32 %v1539, %v197
        %v1542 = vmul.f32 %v1539, %v198
        %v1546 = vrot.slane %v1540, 2
        %v1547 = vrot.slane %v1541, 2
        %v1548 = vsel %vm315, %v1546, %v1547
        %v1549 = vrot.slane %v1542, 2
        %v1550 = vsel %vm315, %v1547, %v1549
        %v1553 = vadd.f32 %v1536, %v1548
        %v1554 = vadd.f32 %v1537, %v1550
        %s1555 = sld [smem:[#allocation2 + $0x19]]
        %v1556 = vstv %s1555
        %v1557 = vmul.f32 %v1556, %v196
        %v1558 = vmul.f32 %v1556, %v197
        %v1559 = vmul.f32 %v1556, %v198
        %v1563 = vrot.slane %v1557, 2
        %v1564 = vrot.slane %v1558, 2
        %v1565 = vsel %vm315, %v1563, %v1564
        %v1566 = vrot.slane %v1559, 2
        %v1567 = vsel %vm315, %v1564, %v1566
        %1568 = vrot.lane.b32.xlu0 %v1565, 127
        %v1569 = vpop.permute.xlu0 %1568
        %1570 = vrot.lane.b32.xlu0 %v1567, 127
        %v1571 = vpop.permute.xlu0 %1570
        %v1574 = vadd.f32 %v1553, %v1569
        %v1575 = vadd.f32 %v1554, %v1571
        %s1576 = sld [smem:[#allocation2 + $0x1a]]
        %v1577 = vstv %s1576
        %v1578 = vmul.f32 %v1577, %v196
        %v1579 = vmul.f32 %v1577, %v197
        %v1580 = vmul.f32 %v1577, %v198
        %v1584 = vrot.slane %v1578, 2
        %v1585 = vrot.slane %v1579, 2
        %v1586 = vsel %vm315, %v1584, %v1585
        %v1587 = vrot.slane %v1580, 2
        %v1588 = vsel %vm315, %v1585, %v1587
        %1589 = vrot.lane.b32.xlu0 %v1586, 126
        %v1590 = vpop.permute.xlu0 %1589
        %1591 = vrot.lane.b32.xlu0 %v1588, 126
        %v1592 = vpop.permute.xlu0 %1591
        %v1595 = vadd.f32 %v1574, %v1590
        %v1596 = vadd.f32 %v1575, %v1592
        %s1597 = sld [smem:[#allocation2 + $0x2d]]
        %v1598 = vstv %s1597
        %v1599 = vmul.f32 %v1598, %v200
        %v1600 = vmul.f32 %v1598, %v201
        %v1601 = vadd.f32 %v1595, %v1599
        %v1602 = vadd.f32 %v1596, %v1600
        %s1603 = sld [smem:[#allocation2 + $0x2e]]
        %v1604 = vstv %s1603
        %v1605 = vmul.f32 %v1604, %v200
        %v1606 = vmul.f32 %v1604, %v201
        %1609 = vrot.lane.b32.xlu0 %v1605, 127
        %v1610 = vpop.permute.xlu0 %1609
        %1611 = vrot.lane.b32.xlu0 %v1606, 127
        %v1612 = vpop.permute.xlu0 %1611
        %v1615 = vadd.f32 %v1601, %v1610
        %v1616 = vadd.f32 %v1602, %v1612
        %s1617 = sld [smem:[#allocation2 + $0x2f]]
        %v1618 = vstv %s1617
        %v1619 = vmul.f32 %v1618, %v200
        %v1620 = vmul.f32 %v1618, %v201
        %1623 = vrot.lane.b32.xlu0 %v1619, 126
        %v1624 = vpop.permute.xlu0 %1623
        %1625 = vrot.lane.b32.xlu0 %v1620, 126
        %v1626 = vpop.permute.xlu0 %1625
        %v1629 = vadd.f32 %v1615, %v1624
        %v1630 = vadd.f32 %v1616, %v1626
        %s1631 = sld [smem:[#allocation2 + $0x30]]
        %v1632 = vstv %s1631
        %v1633 = vmul.f32 %v1632, %v200
        %v1634 = vmul.f32 %v1632, %v201
        %v1635 = vmul.f32 %v1632, %v202
        %v1639 = vrot.slane %v1633, 1
        %v1640 = vrot.slane %v1634, 1
        %v1641 = vsel %vm255, %v1639, %v1640
        %v1642 = vrot.slane %v1635, 1
        %v1643 = vsel %vm255, %v1640, %v1642
        %v1646 = vadd.f32 %v1629, %v1641
        %v1647 = vadd.f32 %v1630, %v1643
        %s1648 = sld [smem:[#allocation2 + $0x31]]
        %v1649 = vstv %s1648
        %v1650 = vmul.f32 %v1649, %v200
        %v1651 = vmul.f32 %v1649, %v201
        %v1652 = vmul.f32 %v1649, %v202
        %v1656 = vrot.slane %v1650, 1
        %v1657 = vrot.slane %v1651, 1
        %v1658 = vsel %vm255, %v1656, %v1657
        %v1659 = vrot.slane %v1652, 1
        %v1660 = vsel %vm255, %v1657, %v1659
        %1661 = vrot.lane.b32.xlu0 %v1658, 127
        %v1662 = vpop.permute.xlu0 %1661
        %1663 = vrot.lane.b32.xlu0 %v1660, 127
        %v1664 = vpop.permute.xlu0 %1663
        %v1667 = vadd.f32 %v1646, %v1662
        %v1668 = vadd.f32 %v1647, %v1664
        %s1669 = sld [smem:[#allocation2 + $0x32]]
        %v1670 = vstv %s1669
        %v1671 = vmul.f32 %v1670, %v200
        %v1672 = vmul.f32 %v1670, %v201
        %v1673 = vmul.f32 %v1670, %v202
        %v1677 = vrot.slane %v1671, 1
        %v1678 = vrot.slane %v1672, 1
        %v1679 = vsel %vm255, %v1677, %v1678
        %v1680 = vrot.slane %v1673, 1
        %v1681 = vsel %vm255, %v1678, %v1680
        %1682 = vrot.lane.b32.xlu0 %v1679, 126
        %v1683 = vpop.permute.xlu0 %1682
        %1684 = vrot.lane.b32.xlu0 %v1681, 126
        %v1685 = vpop.permute.xlu0 %1684
        %v1688 = vadd.f32 %v1667, %v1683
        %v1689 = vadd.f32 %v1668, %v1685
        %s1690 = sld [smem:[#allocation2 + $0x33]]
        %v1691 = vstv %s1690
        %v1692 = vmul.f32 %v1691, %v200
        %v1693 = vmul.f32 %v1691, %v201
        %v1694 = vmul.f32 %v1691, %v202
        %v1698 = vrot.slane %v1692, 2
        %v1699 = vrot.slane %v1693, 2
        %v1700 = vsel %vm315, %v1698, %v1699
        %v1701 = vrot.slane %v1694, 2
        %v1702 = vsel %vm315, %v1699, %v1701
        %v1705 = vadd.f32 %v1688, %v1700
        %v1706 = vadd.f32 %v1689, %v1702
        %s1707 = sld [smem:[#allocation2 + $0x34]]
        %v1708 = vstv %s1707
        %v1709 = vmul.f32 %v1708, %v200
        %v1710 = vmul.f32 %v1708, %v201
        %v1711 = vmul.f32 %v1708, %v202
        %v1715 = vrot.slane %v1709, 2
        %v1716 = vrot.slane %v1710, 2
        %v1717 = vsel %vm315, %v1715, %v1716
        %v1718 = vrot.slane %v1711, 2
        %v1719 = vsel %vm315, %v1716, %v1718
        %1720 = vrot.lane.b32.xlu0 %v1717, 127
        %v1721 = vpop.permute.xlu0 %1720
        %1722 = vrot.lane.b32.xlu0 %v1719, 127
        %v1723 = vpop.permute.xlu0 %1722
        %v1726 = vadd.f32 %v1705, %v1721
        %v1727 = vadd.f32 %v1706, %v1723
        %s1728 = sld [smem:[#allocation2 + $0x35]]
        %v1729 = vstv %s1728
        %v1730 = vmul.f32 %v1729, %v200
        %v1731 = vmul.f32 %v1729, %v201
        %v1732 = vmul.f32 %v1729, %v202
        %v1736 = vrot.slane %v1730, 2
        %v1737 = vrot.slane %v1731, 2
        %v1738 = vsel %vm315, %v1736, %v1737
        %v1739 = vrot.slane %v1732, 2
        %v1740 = vsel %vm315, %v1737, %v1739
        %1741 = vrot.lane.b32.xlu0 %v1738, 126
        %v1742 = vpop.permute.xlu0 %1741
        %1743 = vrot.lane.b32.xlu0 %v1740, 126
        %v1744 = vpop.permute.xlu0 %1743
        %v1747 = vadd.f32 %v1726, %v1742
        %v1748 = vadd.f32 %v1727, %v1744
        %s1749 = sld [smem:[#allocation2 + $0x48]]
        %v1750 = vstv %s1749
        %v1751 = vmul.f32 %v1750, %v204
        %v1752 = vmul.f32 %v1750, %v205
        %v1753 = vadd.f32 %v1747, %v1751
        %v1754 = vadd.f32 %v1748, %v1752
        %s1755 = sld [smem:[#allocation2 + $0x49]]
        %v1756 = vstv %s1755
        %v1757 = vmul.f32 %v1756, %v204
        %v1758 = vmul.f32 %v1756, %v205
        %1761 = vrot.lane.b32.xlu0 %v1757, 127
        %v1762 = vpop.permute.xlu0 %1761
        %1763 = vrot.lane.b32.xlu0 %v1758, 127
        %v1764 = vpop.permute.xlu0 %1763
        %v1767 = vadd.f32 %v1753, %v1762
        %v1768 = vadd.f32 %v1754, %v1764
        %s1769 = sld [smem:[#allocation2 + $0x4a]]
        %v1770 = vstv %s1769
        %v1771 = vmul.f32 %v1770, %v204
        %v1772 = vmul.f32 %v1770, %v205
        %1775 = vrot.lane.b32.xlu0 %v1771, 126
        %v1776 = vpop.permute.xlu0 %1775
        %1777 = vrot.lane.b32.xlu0 %v1772, 126
        %v1778 = vpop.permute.xlu0 %1777
        %v1781 = vadd.f32 %v1767, %v1776
        %v1782 = vadd.f32 %v1768, %v1778
        %s1783 = sld [smem:[#allocation2 + $0x4b]]
        %v1784 = vstv %s1783
        %v1785 = vmul.f32 %v1784, %v204
        %v1786 = vmul.f32 %v1784, %v205
        %v1787 = vmul.f32 %v1784, %v206
        %v1791 = vrot.slane %v1785, 1
        %v1792 = vrot.slane %v1786, 1
        %v1793 = vsel %vm255, %v1791, %v1792
        %v1794 = vrot.slane %v1787, 1
        %v1795 = vsel %vm255, %v1792, %v1794
        %v1798 = vadd.f32 %v1781, %v1793
        %v1799 = vadd.f32 %v1782, %v1795
        %s1800 = sld [smem:[#allocation2 + $0x4c]]
        %v1801 = vstv %s1800
        %v1802 = vmul.f32 %v1801, %v204
        %v1803 = vmul.f32 %v1801, %v205
        %v1804 = vmul.f32 %v1801, %v206
        %v1808 = vrot.slane %v1802, 1
        %v1809 = vrot.slane %v1803, 1
        %v1810 = vsel %vm255, %v1808, %v1809
        %v1811 = vrot.slane %v1804, 1
        %v1812 = vsel %vm255, %v1809, %v1811
        %1813 = vrot.lane.b32.xlu0 %v1810, 127
        %v1814 = vpop.permute.xlu0 %1813
        %1815 = vrot.lane.b32.xlu0 %v1812, 127
        %v1816 = vpop.permute.xlu0 %1815
        %v1819 = vadd.f32 %v1798, %v1814
        %v1820 = vadd.f32 %v1799, %v1816
        %s1821 = sld [smem:[#allocation2 + $0x4d]]
        %v1822 = vstv %s1821
        %v1823 = vmul.f32 %v1822, %v204
        %v1824 = vmul.f32 %v1822, %v205
        %v1825 = vmul.f32 %v1822, %v206
        %v1829 = vrot.slane %v1823, 1
        %v1830 = vrot.slane %v1824, 1
        %v1831 = vsel %vm255, %v1829, %v1830
        %v1832 = vrot.slane %v1825, 1
        %v1833 = vsel %vm255, %v1830, %v1832
        %1834 = vrot.lane.b32.xlu0 %v1831, 126
        %v1835 = vpop.permute.xlu0 %1834
        %1836 = vrot.lane.b32.xlu0 %v1833, 126
        %v1837 = vpop.permute.xlu0 %1836
        %v1840 = vadd.f32 %v1819, %v1835
        %v1841 = vadd.f32 %v1820, %v1837
        %s1842 = sld [smem:[#allocation2 + $0x4e]]
        %v1843 = vstv %s1842
        %v1844 = vmul.f32 %v1843, %v204
        %v1845 = vmul.f32 %v1843, %v205
        %v1846 = vmul.f32 %v1843, %v206
        %v1850 = vrot.slane %v1844, 2
        %v1851 = vrot.slane %v1845, 2
        %v1852 = vsel %vm315, %v1850, %v1851
        %v1853 = vrot.slane %v1846, 2
        %v1854 = vsel %vm315, %v1851, %v1853
        %v1857 = vadd.f32 %v1840, %v1852
        %v1858 = vadd.f32 %v1841, %v1854
        %s1859 = sld [smem:[#allocation2 + $0x4f]]
        %v1860 = vstv %s1859
        %v1861 = vmul.f32 %v1860, %v204
        %v1862 = vmul.f32 %v1860, %v205
        %v1863 = vmul.f32 %v1860, %v206
        %v1867 = vrot.slane %v1861, 2
        %v1868 = vrot.slane %v1862, 2
        %v1869 = vsel %vm315, %v1867, %v1868
        %v1870 = vrot.slane %v1863, 2
        %v1871 = vsel %vm315, %v1868, %v1870
        %1872 = vrot.lane.b32.xlu0 %v1869, 127
        %v1873 = vpop.permute.xlu0 %1872
        %1874 = vrot.lane.b32.xlu0 %v1871, 127
        %v1875 = vpop.permute.xlu0 %1874
        %v1878 = vadd.f32 %v1857, %v1873
        %v1879 = vadd.f32 %v1858, %v1875
        %s1880 = sld [smem:[#allocation2 + $0x50]]
        %v1881 = vstv %s1880
        %v1882 = vmul.f32 %v1881, %v204
        %v1883 = vmul.f32 %v1881, %v205
        %v1884 = vmul.f32 %v1881, %v206
        %v1888 = vrot.slane %v1882, 2
        %v1889 = vrot.slane %v1883, 2
        %v1890 = vsel %vm315, %v1888, %v1889
        %v1891 = vrot.slane %v1884, 2
        %v1892 = vsel %vm315, %v1889, %v1891
        %1893 = vrot.lane.b32.xlu0 %v1890, 126
        %v1894 = vpop.permute.xlu0 %1893
        %1895 = vrot.lane.b32.xlu0 %v1892, 126
        %v1896 = vpop.permute.xlu0 %1895
        %v1899 = vadd.f32 %v1878, %v1894
        %v1900 = vadd.f32 %v1879, %v1896
        %s1901 = sld [smem:[#allocation2 + $0x63]]
        %v1902 = vstv %s1901
        %v1903 = vmul.f32 %v1902, %v208
        %v1904 = vmul.f32 %v1902, %v209
        %v1905 = vadd.f32 %v1899, %v1903
        %v1906 = vadd.f32 %v1900, %v1904
        %s1907 = sld [smem:[#allocation2 + $0x64]]
        %v1908 = vstv %s1907
        %v1909 = vmul.f32 %v1908, %v208
        %v1910 = vmul.f32 %v1908, %v209
        %1913 = vrot.lane.b32.xlu0 %v1909, 127
        %v1914 = vpop.permute.xlu0 %1913
        %1915 = vrot.lane.b32.xlu0 %v1910, 127
        %v1916 = vpop.permute.xlu0 %1915
        %v1919 = vadd.f32 %v1905, %v1914
        %v1920 = vadd.f32 %v1906, %v1916
        %s1921 = sld [smem:[#allocation2 + $0x65]]
        %v1922 = vstv %s1921
        %v1923 = vmul.f32 %v1922, %v208
        %v1924 = vmul.f32 %v1922, %v209
        %1927 = vrot.lane.b32.xlu0 %v1923, 126
        %v1928 = vpop.permute.xlu0 %1927
        %1929 = vrot.lane.b32.xlu0 %v1924, 126
        %v1930 = vpop.permute.xlu0 %1929
        %v1933 = vadd.f32 %v1919, %v1928
        %v1934 = vadd.f32 %v1920, %v1930
        %s1935 = sld [smem:[#allocation2 + $0x66]]
        %v1936 = vstv %s1935
        %v1937 = vmul.f32 %v1936, %v208
        %v1938 = vmul.f32 %v1936, %v209
        %v1939 = vmul.f32 %v1936, %v210
        %v1943 = vrot.slane %v1937, 1
        %v1944 = vrot.slane %v1938, 1
        %v1945 = vsel %vm255, %v1943, %v1944
        %v1946 = vrot.slane %v1939, 1
        %v1947 = vsel %vm255, %v1944, %v1946
        %v1950 = vadd.f32 %v1933, %v1945
        %v1951 = vadd.f32 %v1934, %v1947
        %s1952 = sld [smem:[#allocation2 + $0x67]]
        %v1953 = vstv %s1952
        %v1954 = vmul.f32 %v1953, %v208
        %v1955 = vmul.f32 %v1953, %v209
        %v1956 = vmul.f32 %v1953, %v210
        %v1960 = vrot.slane %v1954, 1
        %v1961 = vrot.slane %v1955, 1
        %v1962 = vsel %vm255, %v1960, %v1961
        %v1963 = vrot.slane %v1956, 1
        %v1964 = vsel %vm255, %v1961, %v1963
        %1965 = vrot.lane.b32.xlu0 %v1962, 127
        %v1966 = vpop.permute.xlu0 %1965
        %1967 = vrot.lane.b32.xlu0 %v1964, 127
        %v1968 = vpop.permute.xlu0 %1967
        %v1971 = vadd.f32 %v1950, %v1966
        %v1972 = vadd.f32 %v1951, %v1968
        %s1973 = sld [smem:[#allocation2 + $0x68]]
        %v1974 = vstv %s1973
        %v1975 = vmul.f32 %v1974, %v208
        %v1976 = vmul.f32 %v1974, %v209
        %v1977 = vmul.f32 %v1974, %v210
        %v1981 = vrot.slane %v1975, 1
        %v1982 = vrot.slane %v1976, 1
        %v1983 = vsel %vm255, %v1981, %v1982
        %v1984 = vrot.slane %v1977, 1
        %v1985 = vsel %vm255, %v1982, %v1984
        %1986 = vrot.lane.b32.xlu0 %v1983, 126
        %v1987 = vpop.permute.xlu0 %1986
        %1988 = vrot.lane.b32.xlu0 %v1985, 126
        %v1989 = vpop.permute.xlu0 %1988
        %v1992 = vadd.f32 %v1971, %v1987
        %v1993 = vadd.f32 %v1972, %v1989
        %s1994 = sld [smem:[#allocation2 + $0x69]]
        %v1995 = vstv %s1994
        %v1996 = vmul.f32 %v1995, %v208
        %v1997 = vmul.f32 %v1995, %v209
        %v1998 = vmul.f32 %v1995, %v210
        %v2002 = vrot.slane %v1996, 2
        %v2003 = vrot.slane %v1997, 2
        %v2004 = vsel %vm315, %v2002, %v2003
        %v2005 = vrot.slane %v1998, 2
        %v2006 = vsel %vm315, %v2003, %v2005
        %v2009 = vadd.f32 %v1992, %v2004
        %v2010 = vadd.f32 %v1993, %v2006
        %s2011 = sld [smem:[#allocation2 + $0x6a]]
        %v2012 = vstv %s2011
        %v2013 = vmul.f32 %v2012, %v208
        %v2014 = vmul.f32 %v2012, %v209
        %v2015 = vmul.f32 %v2012, %v210
        %v2019 = vrot.slane %v2013, 2
        %v2020 = vrot.slane %v2014, 2
        %v2021 = vsel %vm315, %v2019, %v2020
        %v2022 = vrot.slane %v2015, 2
        %v2023 = vsel %vm315, %v2020, %v2022
        %2024 = vrot.lane.b32.xlu0 %v2021, 127
        %v2025 = vpop.permute.xlu0 %2024
        %2026 = vrot.lane.b32.xlu0 %v2023, 127
        %v2027 = vpop.permute.xlu0 %2026
        %v2030 = vadd.f32 %v2009, %v2025
        %v2031 = vadd.f32 %v2010, %v2027
        %s2032 = sld [smem:[#allocation2 + $0x6b]]
        %v2033 = vstv %s2032
        %v2034 = vmul.f32 %v2033, %v208
        %v2035 = vmul.f32 %v2033, %v209
        %v2036 = vmul.f32 %v2033, %v210
        %v2040 = vrot.slane %v2034, 2
        %v2041 = vrot.slane %v2035, 2
        %v2042 = vsel %vm315, %v2040, %v2041
        %v2043 = vrot.slane %v2036, 2
        %v2044 = vsel %vm315, %v2041, %v2043
        %2045 = vrot.lane.b32.xlu0 %v2042, 126
        %v2046 = vpop.permute.xlu0 %2045
        %2047 = vrot.lane.b32.xlu0 %v2044, 126
        %v2048 = vpop.permute.xlu0 %2047
        %v2051 = vadd.f32 %v2030, %v2046
        %v2052 = vadd.f32 %v2031, %v2048
        %v2053 = vtanh.pop %v2051
        %v2054 = vtanh.pop %v2052
        %s2055 = scalar_lea.vmem %s190, 32 [#allocation7]
        %2056 = vst.msk [vmem:[%s2055] sm:$0xff] %vm825, %v2053
        %2057 = vst.msk [vmem:[%s2055 + $0x8] sm:$0xff] %vm825, %v2054
        %s2058 = sand.u32 %s95, 1
        %s2059 = scalar_lea.sflag [#allocation3], %s2058
        %s2060 = sand.u32 %s95, 1
        %s2061 = smul.addr %s2060, 48
        %s2062 = scalar_lea.vmem [#allocation7], %s2061
        // Predicated region
        $region41: #{tpu_custom_call.1} parent=31 // pred_check
          %p2063 = pneg %p105
        $region42: #{tpu_custom_call.1} parent=31 // pred_check_branch
          %2065 = sbr.rel (%p2063) target = $region44
        $region43: #{tpu_custom_call.1} parent=31 // pred_region
          %2067 = vsyncadd %s2059, 0
          %s2068 = smul.addr %s19, 6
          %s2069 = smul.addr %s2068, 8
          %s2070 = scalar_lea.hbm %s3, %s2069
          %s2071 = sshll.u32 %s2062, 4
          %s2072 = int_to_ptr.vmem [resolvable:$true] %s2071
          %s2073 = sshll.u32 %s2070, 4
          %s2074 = int_to_ptr.hbm [resolvable:$true] %s2073
          %2079 = dma.vmem_to_hbm [thread:$0]  %s2072, 768, %s2074, %s2059, 128, 128, 8
        $region44: #{tpu_custom_call.1} parent=31 // pred_fallthru
          _
      $region32: #{tpu_custom_call.1} parent=5 // pred_fallthru
        _
      %p2080 = scmp.le.s32.totalorder 2, %s14
      // Predicated region
      $region45: #{tpu_custom_call.1} parent=5 // pred_check
        %p2081 = pneg %p2080
      $region46: #{tpu_custom_call.1} parent=5 // pred_check_branch
        %2083 = sbr.rel (%p2081) target = $region48
      $region47: #{tpu_custom_call.1} parent=5 // pred_region
        %s2084 = ssub.s32 %s14, 2
        // Predicated region
        $region49: #{tpu_custom_call.1} parent=47 // pred_check
          %p2085 = pneg %p111
        $region50: #{tpu_custom_call.1} parent=47 // pred_check_branch
          %2087 = sbr.rel (%p2085) target = $region52
        $region51: #{tpu_custom_call.1} parent=47 // pred_region
          %s2088 = sand.u32 %s96, 1
          %s2089 = scalar_lea.sflag [#allocation3], %s2088
          %s2090 = sand.u32 %s96, 1
          %s2091 = smul.addr %s2090, 48
          %s2092 = scalar_lea.vmem [#allocation7], %s2091
          %2094 = dma.done %s2089, 768
        $region52: #{tpu_custom_call.1} parent=47 // pred_fallthru
          _
      $region48: #{tpu_custom_call.1} parent=5 // pred_fallthru
        _
    $region6: #{tpu_custom_call.1} parent=1 // loop_footer
      %s18 = sadd.s32 1, %s14
    $region7: #{tpu_custom_call.1} parent=1 // loop_footer_branch
      %13 = sbr.rel target = $region3
    $region8: #{tpu_custom_call.1} parent=1 // loop_exit
      _
    %2095 = vsyncpa [#allocation3], 1
    %s2096 = scalar_lea.sflag [#allocation3], 1
    %2097 = vsyncpa %s2096, 1
    %2098 = vsyncpa [#allocation4], 1
    %s2099 = scalar_lea.sflag [#allocation4], 1
    %2100 = vsyncpa %s2099, 1
    %2101 = vsyncpa [#allocation6], 1

</llo_original>
